<compile_context>
chip_gen: v7x
topology: tpu7x:2x2x1
jax: 0.10.0
libtpu: 0.0.40
codegen_flags: <defaults>
</compile_context>

<pallas_src>
import functools

import jax
import jax.numpy as jnp
from jax.experimental import pallas as pl
from jax.experimental.pallas import tpu as pltpu


def _round_up(x, m):
    return (x + m - 1) // m * m


def _ae_kernel(xp_ref, xq_ref, w1_ref, b1_ref, w2_ref, b2_ref,
               hp_ref, hq_ref, lsum_ref, *, n_valid_rows):
    """One batch tile of the AutoEncoder forward for both xp and xq.

    xp_ref, xq_ref : (TB, D)   input tiles (native dtype & width)
    w1_ref         : (D, H)    fc1.weight pre-transposed to (in, out), bf16
    b1_ref         : (1, H)    fc1.bias, f32
    w2_ref         : (H, D)    fc2.weight pre-transposed to (in, out), bf16
    b2_ref         : (1, D)    fc2.bias, f32
    hp_ref, hq_ref : (TB, H)   hidden output tiles (input dtype)
    lsum_ref       : (1, 1, D) per-tile, per-lane partial sum of sq. error, f32
    """
    tb = xp_ref.shape[0]
    row_ids = (jax.lax.broadcasted_iota(jnp.int32, (tb, 1), 0)
               + pl.program_id(0) * tb)
    row_mask = row_ids < n_valid_rows          # masks the ragged last tile

    def single(x_ref, h_ref):
        x_f32 = x_ref[...].astype(jnp.float32)      # f32 copy for the residual
        x_mxu = x_ref[...].astype(jnp.bfloat16)     # bf16 feeds the MXU

        # fc1: plain x @ W1 (W1 is already (in, out)); f32 accumulation.
        h = jnp.dot(x_mxu, w1_ref[...],
                    preferred_element_type=jnp.float32) + b1_ref[...]
        # TODO(synk): nn.Dropout(p) is stochastic in train mode; eval-mode
        # identity semantics are implemented here for determinism.

        # fc2: h @ W2.
        y = jnp.dot(h.astype(jnp.bfloat16), w2_ref[...],
                    preferred_element_type=jnp.float32) + b2_ref[...]

        # Squared-error residual; zero any rows past the real batch.
        d = jnp.where(row_mask, x_f32 - y, 0.0)

        h_ref[...] = h.astype(h_ref.dtype)
        return jnp.sum(d * d, axis=0, keepdims=True)      # (1, D)

    sp = single(xp_ref, hp_ref)
    sq = single(xq_ref, hq_ref)
    lsum_ref[0] = sp + sq


def prepare_params(w1, b1, w2, b2):
    """One-time param prep (outside the hot path): transpose the PyTorch
    [out, in] weights to (in, out) so the kernel contracts with a plain x @ W,
    and cast weights to bf16 (accumulation stays f32 in-kernel)."""
    H, D = w1.shape
    w1_t = jnp.asarray(w1, jnp.float32).T.astype(jnp.bfloat16)    # (D, H)
    b1_r = jnp.asarray(b1, jnp.float32).reshape(1, H)
    w2_t = jnp.asarray(w2, jnp.float32).T.astype(jnp.bfloat16)    # (H, D)
    b2_r = jnp.asarray(b2, jnp.float32).reshape(1, D)
    return w1_t, b1_r, w2_t, b2_r


@functools.partial(jax.jit,
                   static_argnames=("block_rows", "single_buffer_params"))
def autoencoder_forward(xp, xq, w1_t, b1_r, w2_t, b2_r, *, block_rows=1024,
                        single_buffer_params=True):
    """Fused AutoEncoder forward: returns (hp, hq, lp + lq).

    xp, xq : (..., D) inputs of the same shape (Linear acts on the last dim).
    w1_t, b1_r, w2_t, b2_r : params from prepare_params().
    """
    assert xp.shape == xq.shape, "xp and xq must share a shape"
    D = xp.shape[-1]
    H = w1_t.shape[1]
    assert w1_t.shape == (D, H) and w2_t.shape == (H, D)

    lead = xp.shape[:-1]
    n_rows = 1
    for s in lead:
        n_rows *= s
    xp2 = xp.reshape(n_rows, D)       # free: collapses contiguous leading dims
    xq2 = xq.reshape(n_rows, D)

    # ---- batch tile selection ---------------------------------------------
    tb = min(block_rows, n_rows)
    if n_rows >= 16:
        # Keep >= 2 parallel tiles so both v7x TensorCores get work.
        tb = min(tb, -(-n_rows // 2))
    tb = _round_up(tb, 8)
    if tb >= n_rows:
        tb = n_rows                   # single full-extent block (always legal)

    # ---- generation-aware VMEM budget ---------------------------------------
    try:
        vmem_cap = int(pltpu.get_tpu_info().vmem_capacity_bytes)
    except Exception:                 # conservative default: v7x per-core VMEM
        vmem_cap = 64 << 20
    budget = int(vmem_cap * 0.85)     # leave headroom for compiler scratch

    x_bytes = jnp.dtype(xp.dtype).itemsize
    w_bytes = jnp.dtype(w1_t.dtype).itemsize
    param_bytes = ((w1_t.size + w2_t.size) * w_bytes
                   + (b1_r.size + b2_r.size) * 4)
    if not single_buffer_params:
        param_bytes *= 2              # default pipelining double-buffers them

    def tile_bytes(t):
        return (2 * (2 * t * D * x_bytes)     # xp/xq tiles, double buffered
                + 2 * (2 * t * H * x_bytes)   # hp/hq tiles, double buffered
                + 2 * (D * 4))                # loss partial

    while tb > 8 and param_bytes + tile_bytes(tb) > budget:
        tb = max(8, _round_up(tb // 2, 8))

    n_tiles = pl.cdiv(n_rows, tb)
    est = param_bytes + tile_bytes(tb)
    vmem_limit = int(min(max(2 * est + (4 << 20), 32 << 20), budget))

    # ---- block specs --------------------------------------------------------
    def param_spec(shape):
        if single_buffer_params:
            # Constant blocks: one VMEM buffer is enough (halves their footprint).
            return pl.BlockSpec(shape, lambda i: (0, 0),
                                pipeline_mode=pl.Buffered(1))
        return pl.BlockSpec(shape, lambda i: (0, 0))

    kernel = functools.partial(_ae_kernel, n_valid_rows=n_rows)

    hp2, hq2, lsum = pl.pallas_call(
        kernel,
        grid=(n_tiles,),
        in_specs=[
            pl.BlockSpec((tb, D), lambda i: (i, 0)),     # xp tile
            pl.BlockSpec((tb, D), lambda i: (i, 0)),     # xq tile
            param_spec((D, H)),                          # W1 (resident)
            param_spec((1, H)),                          # b1 (resident)
            param_spec((H, D)),                          # W2 (resident)
            param_spec((1, D)),                          # b2 (resident)
        ],
        out_specs=(
            pl.BlockSpec((tb, H), lambda i: (i, 0)),        # hp slab
            pl.BlockSpec((tb, H), lambda i: (i, 0)),        # hq slab
            pl.BlockSpec((1, 1, D), lambda i: (i, 0, 0)),   # loss partials
        ),
        out_shape=(
            jax.ShapeDtypeStruct((n_rows, H), xp.dtype),
            jax.ShapeDtypeStruct((n_rows, H), xq.dtype),
            jax.ShapeDtypeStruct((n_tiles, 1, D), jnp.float32),
        ),
        compiler_params=pltpu.CompilerParams(
            dimension_semantics=("parallel",),
            vmem_limit_bytes=vmem_limit,
        ),
    )(xp2, xq2, w1_t, b1_r, w2_t, b2_r)

    hp = hp2.reshape(*lead, H)
    hq = hq2.reshape(*lead, H)
    # lp + lq = (ssq_p + ssq_q) / numel(x)   (both means share the denominator).
    loss = jnp.sum(lsum) / jnp.float32(n_rows * D)
    return hp, hq, loss


def init_params(key, input_size, hidden_size):
    """PyTorch nn.Linear default init: U[-1/sqrt(fan_in), 1/sqrt(fan_in)]."""
    k1, k2, k3, k4 = jax.random.split(key, 4)
    bound1 = 1.0 / jnp.sqrt(jnp.float32(input_size))
    bound2 = 1.0 / jnp.sqrt(jnp.float32(hidden_size))
    w1 = jax.random.uniform(k1, (hidden_size, input_size), jnp.float32, -bound1, bound1)
    b1 = jax.random.uniform(k2, (hidden_size,), jnp.float32, -bound1, bound1)
    w2 = jax.random.uniform(k3, (input_size, hidden_size), jnp.float32, -bound2, bound2)
    b2 = jax.random.uniform(k4, (input_size,), jnp.float32, -bound2, bound2)
    return w1, b1, w2, b2


if __name__ == "__main__":
    # DRCN's AutoEncoder is applied to (batch, seq, feat) activations; Linear
    # acts on the last dim.  batch*seq = 21 exercises ragged (partial) batch
    # tiles, and D=32 / H=64 exercise the native (non-128) lane widths.
    BATCH, SEQ, INPUT_SIZE, HIDDEN_SIZE = 3, 7, 32, 64

    key = jax.random.PRNGKey(0)
    kx, kq, kp = jax.random.split(key, 3)
    xp = jax.random.normal(kx, (BATCH, SEQ, INPUT_SIZE), jnp.float32)
    xq = jax.random.normal(kq, (BATCH, SEQ, INPUT_SIZE), jnp.float32)
    w1, b1, w2, b2 = init_params(kp, INPUT_SIZE, HIDDEN_SIZE)
    params = prepare_params(w1, b1, w2, b2)

    # Prefer single-buffered resident params; fall back to default double
    # buffering if this Pallas build rejects pl.Buffered(1).
    single_buf = True
    try:
        out = autoencoder_forward(xp, xq, *params, block_rows=8,
                                  single_buffer_params=single_buf)
        jax.block_until_ready(out)
    except Exception:
        single_buf = False
        out = autoencoder_forward(xp, xq, *params, block_rows=8,
                                  single_buffer_params=single_buf)
        jax.block_until_ready(out)
    hp, hq, loss = out

    # Default (large) batch tiles -> 2 parallel tiles of 16 rows here.
    hp2, hq2, loss2 = autoencoder_forward(xp, xq, *params,
                                          single_buffer_params=single_buf)
    jax.block_until_ready((hp2, hq2, loss2))

    # Pure-JAX f32 reference (eval-mode dropout = identity).  Tolerances cover
    # the bf16 MXU inputs (accumulation stays f32).
    def ref_single(x):
        h = x @ w1.T + b1
        y = h @ w2.T + b2
        return h, jnp.mean((x - y) ** 2)

    hp_r, lp_r = ref_single(xp)
    hq_r, lq_r = ref_single(xq)
    loss_r = lp_r + lq_r

    assert hp.shape == (BATCH, SEQ, HIDDEN_SIZE)
    assert hq.shape == (BATCH, SEQ, HIDDEN_SIZE)
    assert jnp.allclose(hp, hp_r, atol=5e-2, rtol=5e-2), "hp mismatch"
    assert jnp.allclose(hq, hq_r, atol=5e-2, rtol=5e-2), "hq mismatch"
    assert jnp.allclose(loss, loss_r, atol=5e-2, rtol=5e-2), "loss mismatch"
    assert jnp.allclose(hp2, hp_r, atol=5e-2, rtol=5e-2), "hp mismatch (big tiles)"
    assert jnp.allclose(hq2, hq_r, atol=5e-2, rtol=5e-2), "hq mismatch (big tiles)"
    assert jnp.allclose(loss2, loss_r, atol=5e-2, rtol=5e-2), "loss mismatch (big tiles)"

    print("KERNEL_OK")
</pallas_src>

<mosaic_0001>
module attributes {stable_mosaic.version = 11 : i64} {
  func.func @_ae_kernel(%arg0: i32, %arg1: memref<8x32xf32, #tpu.memory_space<vmem>>, %arg2: memref<8x32xf32, #tpu.memory_space<vmem>>, %arg3: memref<32x64xbf16, #tpu.memory_space<vmem>>, %arg4: memref<1x64xf32, #tpu.memory_space<vmem>>, %arg5: memref<64x32xbf16, #tpu.memory_space<vmem>>, %arg6: memref<1x32xf32, #tpu.memory_space<vmem>>, %arg7: memref<8x64xf32, #tpu.memory_space<vmem>>, %arg8: memref<8x64xf32, #tpu.memory_space<vmem>>, %arg9: memref<1x1x32xf32, #tpu.memory_space<vmem>>) attributes {dimension_semantics = [#tpu.dimension_semantics<parallel>], iteration_bounds = array<i64: 3>, scalar_prefetch = 0 : i64, scratch_operands = 0 : i64, tpu.core_type = #tpu.core_type<tc>, window_params = [{transform_indices = @transform_0, window_bounds = array<i64: 8, 32>}, {transform_indices = @transform_1, window_bounds = array<i64: 8, 32>}, {pipeline_mode = #tpu.pipeline_mode<synchronous>, transform_indices = @transform_2, window_bounds = array<i64: 32, 64>}, {pipeline_mode = #tpu.pipeline_mode<synchronous>, transform_indices = @transform_3, window_bounds = array<i64: 1, 64>}, {pipeline_mode = #tpu.pipeline_mode<synchronous>, transform_indices = @transform_4, window_bounds = array<i64: 64, 32>}, {pipeline_mode = #tpu.pipeline_mode<synchronous>, transform_indices = @transform_5, window_bounds = array<i64: 1, 32>}, {transform_indices = @transform_6, window_bounds = array<i64: 8, 64>}, {transform_indices = @transform_7, window_bounds = array<i64: 8, 64>}, {transform_indices = @transform_8, window_bounds = array<i64: 1, 1, 32>}]} {
    %0 = tpu.iota {dimensions = array<i32: 0>} : vector<8x1xi32>
    %c8_i32 = arith.constant 8 : i32
    %1 = arith.muli %arg0, %c8_i32 : i32
    %2 = vector.broadcast %1 : i32 to vector<8x1xi32>
    %3 = arith.addi %0, %2 : vector<8x1xi32>
    %c21_i32 = arith.constant 21 : i32
    %4 = vector.broadcast %c21_i32 : i32 to vector<8x1xi32>
    %5 = arith.cmpi slt, %3, %4 : vector<8x1xi32>
    %c0 = arith.constant 0 : index
    %c0_0 = arith.constant 0 : index
    %6 = vector.load %arg1[%c0, %c0_0] : memref<8x32xf32, #tpu.memory_space<vmem>>, vector<8x32xf32>
    %c0_1 = arith.constant 0 : index
    %c0_2 = arith.constant 0 : index
    %7 = vector.load %arg1[%c0_1, %c0_2] : memref<8x32xf32, #tpu.memory_space<vmem>>, vector<8x32xf32>
    %8 = arith.truncf %7 : vector<8x32xf32> to vector<8x32xbf16>
    %c0_3 = arith.constant 0 : index
    %c0_4 = arith.constant 0 : index
    %9 = vector.load %arg3[%c0_3, %c0_4] : memref<32x64xbf16, #tpu.memory_space<vmem>>, vector<32x64xbf16>
    %cst = arith.constant dense<0.000000e+00> : vector<8x64xf32>
    %10 = tpu.matmul %8, %9, %cst {dimension_numbers = #tpu.dot_dimension_numbers<[1], [0], [0], [1], [0, 0, 1, 1], [], []>} : vector<8x32xbf16>, vector<32x64xbf16>, vector<8x64xf32> -> vector<8x64xf32>
    %c0_5 = arith.constant 0 : index
    %c0_6 = arith.constant 0 : index
    %11 = vector.load %arg4[%c0_5, %c0_6] : memref<1x64xf32, #tpu.memory_space<vmem>>, vector<1x64xf32>
    %12 = vector.broadcast %11 : vector<1x64xf32> to vector<8x64xf32>
    %13 = arith.addf %10, %12 : vector<8x64xf32>
    %14 = arith.truncf %13 : vector<8x64xf32> to vector<8x64xbf16>
    %c0_7 = arith.constant 0 : index
    %c0_8 = arith.constant 0 : index
    %15 = vector.load %arg5[%c0_7, %c0_8] : memref<64x32xbf16, #tpu.memory_space<vmem>>, vector<64x32xbf16>
    %cst_9 = arith.constant dense<0.000000e+00> : vector<8x32xf32>
    %16 = tpu.matmul %14, %15, %cst_9 {dimension_numbers = #tpu.dot_dimension_numbers<[1], [0], [0], [1], [0, 0, 1, 1], [], []>} : vector<8x64xbf16>, vector<64x32xbf16>, vector<8x32xf32> -> vector<8x32xf32>
    %c0_10 = arith.constant 0 : index
    %c0_11 = arith.constant 0 : index
    %17 = vector.load %arg6[%c0_10, %c0_11] : memref<1x32xf32, #tpu.memory_space<vmem>>, vector<1x32xf32>
    %18 = vector.broadcast %17 : vector<1x32xf32> to vector<8x32xf32>
    %19 = arith.addf %16, %18 : vector<8x32xf32>
    %20 = arith.subf %6, %19 : vector<8x32xf32>
    %cst_12 = arith.constant 0.000000e+00 : f32
    %21 = vector.shape_cast %5 : vector<8x1xi1> to vector<8x1xi1>
    %22 = vector.broadcast %21 : vector<8x1xi1> to vector<8x32xi1>
    %23 = vector.broadcast %cst_12 : f32 to vector<8x32xf32>
    %24 = arith.select %22, %20, %23 : vector<8x32xi1>, vector<8x32xf32>
    %c0_13 = arith.constant 0 : index
    %c0_14 = arith.constant 0 : index
    %25 = vector.load %arg7[%c0_13, %c0_14] : memref<8x64xf32, #tpu.memory_space<vmem>>, vector<8x64xf32>
    tpu.vector_store %arg7[%c0_13, %c0_14], %13 {strides = array<i32>} : memref<8x64xf32, #tpu.memory_space<vmem>>, vector<8x64xf32>,
    %26 = arith.mulf %24, %24 : vector<8x32xf32>
    %cst_15 = arith.constant dense<0.000000e+00> : vector<32xf32>
    %27 = vector.multi_reduction <add>, %26, %cst_15 [0] : vector<8x32xf32> to vector<32xf32>
    %28 = vector.shape_cast %27 : vector<32xf32> to vector<1x32xf32>
    %c0_16 = arith.constant 0 : index
    %c0_17 = arith.constant 0 : index
    %29 = vector.load %arg2[%c0_16, %c0_17] : memref<8x32xf32, #tpu.memory_space<vmem>>, vector<8x32xf32>
    %c0_18 = arith.constant 0 : index
    %c0_19 = arith.constant 0 : index
    %30 = vector.load %arg2[%c0_18, %c0_19] : memref<8x32xf32, #tpu.memory_space<vmem>>, vector<8x32xf32>
    %31 = arith.truncf %30 : vector<8x32xf32> to vector<8x32xbf16>
    %c0_20 = arith.constant 0 : index
    %c0_21 = arith.constant 0 : index
    %32 = vector.load %arg3[%c0_20, %c0_21] : memref<32x64xbf16, #tpu.memory_space<vmem>>, vector<32x64xbf16>
    %cst_22 = arith.constant dense<0.000000e+00> : vector<8x64xf32>
    %33 = tpu.matmul %31, %32, %cst_22 {dimension_numbers = #tpu.dot_dimension_numbers<[1], [0], [0], [1], [0, 0, 1, 1], [], []>} : vector<8x32xbf16>, vector<32x64xbf16>, vector<8x64xf32> -> vector<8x64xf32>
    %c0_23 = arith.constant 0 : index
    %c0_24 = arith.constant 0 : index
    %34 = vector.load %arg4[%c0_23, %c0_24] : memref<1x64xf32, #tpu.memory_space<vmem>>, vector<1x64xf32>
    %35 = vector.broadcast %34 : vector<1x64xf32> to vector<8x64xf32>
    %36 = arith.addf %33, %35 : vector<8x64xf32>
    %37 = arith.truncf %36 : vector<8x64xf32> to vector<8x64xbf16>
    %c0_25 = arith.constant 0 : index
    %c0_26 = arith.constant 0 : index
    %38 = vector.load %arg5[%c0_25, %c0_26] : memref<64x32xbf16, #tpu.memory_space<vmem>>, vector<64x32xbf16>
    %cst_27 = arith.constant dense<0.000000e+00> : vector<8x32xf32>
    %39 = tpu.matmul %37, %38, %cst_27 {dimension_numbers = #tpu.dot_dimension_numbers<[1], [0], [0], [1], [0, 0, 1, 1], [], []>} : vector<8x64xbf16>, vector<64x32xbf16>, vector<8x32xf32> -> vector<8x32xf32>
    %c0_28 = arith.constant 0 : index
    %c0_29 = arith.constant 0 : index
    %40 = vector.load %arg6[%c0_28, %c0_29] : memref<1x32xf32, #tpu.memory_space<vmem>>, vector<1x32xf32>
    %41 = vector.broadcast %40 : vector<1x32xf32> to vector<8x32xf32>
    %42 = arith.addf %39, %41 : vector<8x32xf32>
    %43 = arith.subf %29, %42 : vector<8x32xf32>
    %cst_30 = arith.constant 0.000000e+00 : f32
    %44 = vector.shape_cast %5 : vector<8x1xi1> to vector<8x1xi1>
    %45 = vector.broadcast %44 : vector<8x1xi1> to vector<8x32xi1>
    %46 = vector.broadcast %cst_30 : f32 to vector<8x32xf32>
    %47 = arith.select %45, %43, %46 : vector<8x32xi1>, vector<8x32xf32>
    %c0_31 = arith.constant 0 : index
    %c0_32 = arith.constant 0 : index
    %48 = vector.load %arg8[%c0_31, %c0_32] : memref<8x64xf32, #tpu.memory_space<vmem>>, vector<8x64xf32>
    tpu.vector_store %arg8[%c0_31, %c0_32], %36 {strides = array<i32>} : memref<8x64xf32, #tpu.memory_space<vmem>>, vector<8x64xf32>,
    %49 = arith.mulf %47, %47 : vector<8x32xf32>
    %cst_33 = arith.constant dense<0.000000e+00> : vector<32xf32>
    %50 = vector.multi_reduction <add>, %49, %cst_33 [0] : vector<8x32xf32> to vector<32xf32>
    %51 = vector.shape_cast %50 : vector<32xf32> to vector<1x32xf32>
    %52 = arith.addf %28, %51 : vector<1x32xf32>
    %c0_34 = arith.constant 0 : index
    %c0_35 = arith.constant 0 : index
    %c0_36 = arith.constant 0 : index
    %53 = vector.load %arg9[%c0_34, %c0_35, %c0_36] : memref<1x1x32xf32, #tpu.memory_space<vmem>>, vector<1x1x32xf32>
    %54 = vector.shape_cast %53 : vector<1x1x32xf32> to vector<1x32xf32>
    %55 = vector.shape_cast %52 : vector<1x32xf32> to vector<1x1x32xf32>
    tpu.vector_store %arg9[%c0_34, %c0_35, %c0_36], %55 {strides = array<i32>} : memref<1x1x32xf32, #tpu.memory_space<vmem>>, vector<1x1x32xf32>,
    return
  }
  func.func @transform_0(%arg0: i32) -> (i32, i32) {
    %c0_i32 = arith.constant 0 : i32
    %c0_i32_0 = arith.constant 0 : i32
    return %arg0, %c0_i32 : i32, i32
  }
  func.func @transform_1(%arg0: i32) -> (i32, i32) {
    %c0_i32 = arith.constant 0 : i32
    %c0_i32_0 = arith.constant 0 : i32
    return %arg0, %c0_i32 : i32, i32
  }
  func.func @transform_2(%arg0: i32) -> (i32, i32) {
    %c0_i32 = arith.constant 0 : i32
    %c0_i32_0 = arith.constant 0 : i32
    %c0_i32_1 = arith.constant 0 : i32
    return %c0_i32, %c0_i32_0 : i32, i32
  }
  func.func @transform_3(%arg0: i32) -> (i32, i32) {
    %c0_i32 = arith.constant 0 : i32
    %c0_i32_0 = arith.constant 0 : i32
    %c0_i32_1 = arith.constant 0 : i32
    return %c0_i32, %c0_i32_0 : i32, i32
  }
  func.func @transform_4(%arg0: i32) -> (i32, i32) {
    %c0_i32 = arith.constant 0 : i32
    %c0_i32_0 = arith.constant 0 : i32
    %c0_i32_1 = arith.constant 0 : i32
    return %c0_i32, %c0_i32_0 : i32, i32
  }
  func.func @transform_5(%arg0: i32) -> (i32, i32) {
    %c0_i32 = arith.constant 0 : i32
    %c0_i32_0 = arith.constant 0 : i32
    %c0_i32_1 = arith.constant 0 : i32
    return %c0_i32, %c0_i32_0 : i32, i32
  }
  func.func @transform_6(%arg0: i32) -> (i32, i32) {
    %c0_i32 = arith.constant 0 : i32
    %c0_i32_0 = arith.constant 0 : i32
    return %arg0, %c0_i32 : i32, i32
  }
  func.func @transform_7(%arg0: i32) -> (i32, i32) {
    %c0_i32 = arith.constant 0 : i32
    %c0_i32_0 = arith.constant 0 : i32
    return %arg0, %c0_i32 : i32, i32
  }
  func.func @transform_8(%arg0: i32) -> (i32, i32, i32) {
    %c0_i32 = arith.constant 0 : i32
    %c0_i32_0 = arith.constant 0 : i32
    %c0_i32_1 = arith.constant 0 : i32
    return %arg0, %c0_i32, %c0_i32_0 : i32, i32, i32
  }
}

module attributes {stable_mosaic.version = 11 : i64} {
  func.func @_ae_kernel(%arg0: i32, %arg1: memref<8x32xf32, #tpu.memory_space<vmem>>, %arg2: memref<8x32xf32, #tpu.memory_space<vmem>>, %arg3: memref<32x64xbf16, #tpu.memory_space<vmem>>, %arg4: memref<1x64xf32, #tpu.memory_space<vmem>>, %arg5: memref<64x32xbf16, #tpu.memory_space<vmem>>, %arg6: memref<1x32xf32, #tpu.memory_space<vmem>>, %arg7: memref<8x64xf32, #tpu.memory_space<vmem>>, %arg8: memref<8x64xf32, #tpu.memory_space<vmem>>, %arg9: memref<1x1x32xf32, #tpu.memory_space<vmem>>) attributes {dimension_semantics = [#tpu.dimension_semantics<parallel>], iteration_bounds = array<i64: 3>, scalar_prefetch = 0 : i64, scratch_operands = 0 : i64, tpu.core_type = #tpu.core_type<tc>, window_params = [{transform_indices = @transform_0, window_bounds = array<i64: 8, 32>}, {transform_indices = @transform_1, window_bounds = array<i64: 8, 32>}, {pipeline_mode = #tpu.pipeline_mode<synchronous>, transform_indices = @transform_2, window_bounds = array<i64: 32, 64>}, {pipeline_mode = #tpu.pipeline_mode<synchronous>, transform_indices = @transform_3, window_bounds = array<i64: 1, 64>}, {pipeline_mode = #tpu.pipeline_mode<synchronous>, transform_indices = @transform_4, window_bounds = array<i64: 64, 32>}, {pipeline_mode = #tpu.pipeline_mode<synchronous>, transform_indices = @transform_5, window_bounds = array<i64: 1, 32>}, {transform_indices = @transform_6, window_bounds = array<i64: 8, 64>}, {transform_indices = @transform_7, window_bounds = array<i64: 8, 64>}, {transform_indices = @transform_8, window_bounds = array<i64: 1, 1, 32>}]} {
    %0 = tpu.iota {dimensions = array<i32: 0>} : vector<8x1xi32>
    %c8_i32 = arith.constant 8 : i32
    %1 = arith.muli %arg0, %c8_i32 : i32
    %2 = vector.broadcast %1 : i32 to vector<8x1xi32>
    %3 = arith.addi %0, %2 : vector<8x1xi32>
    %c21_i32 = arith.constant 21 : i32
    %4 = vector.broadcast %c21_i32 : i32 to vector<8x1xi32>
    %5 = arith.cmpi slt, %3, %4 : vector<8x1xi32>
    %c0 = arith.constant 0 : index
    %c0_0 = arith.constant 0 : index
    %6 = vector.load %arg1[%c0, %c0_0] : memref<8x32xf32, #tpu.memory_space<vmem>>, vector<8x32xf32>
    %c0_1 = arith.constant 0 : index
    %c0_2 = arith.constant 0 : index
    %7 = vector.load %arg1[%c0_1, %c0_2] : memref<8x32xf32, #tpu.memory_space<vmem>>, vector<8x32xf32>
    %8 = arith.truncf %7 : vector<8x32xf32> to vector<8x32xbf16>
    %c0_3 = arith.constant 0 : index
    %c0_4 = arith.constant 0 : index
    %9 = vector.load %arg3[%c0_3, %c0_4] : memref<32x64xbf16, #tpu.memory_space<vmem>>, vector<32x64xbf16>
    %cst = arith.constant dense<0.000000e+00> : vector<8x64xf32>
    %10 = tpu.matmul %8, %9, %cst {dimension_numbers = #tpu.dot_dimension_numbers<[1], [0], [0], [1], [0, 0, 1, 1], [], []>} : vector<8x32xbf16>, vector<32x64xbf16>, vector<8x64xf32> -> vector<8x64xf32>
    %c0_5 = arith.constant 0 : index
    %c0_6 = arith.constant 0 : index
    %11 = vector.load %arg4[%c0_5, %c0_6] : memref<1x64xf32, #tpu.memory_space<vmem>>, vector<1x64xf32>
    %12 = vector.broadcast %11 : vector<1x64xf32> to vector<8x64xf32>
    %13 = arith.addf %10, %12 : vector<8x64xf32>
    %14 = arith.truncf %13 : vector<8x64xf32> to vector<8x64xbf16>
    %c0_7 = arith.constant 0 : index
    %c0_8 = arith.constant 0 : index
    %15 = vector.load %arg5[%c0_7, %c0_8] : memref<64x32xbf16, #tpu.memory_space<vmem>>, vector<64x32xbf16>
    %cst_9 = arith.constant dense<0.000000e+00> : vector<8x32xf32>
    %16 = tpu.matmul %14, %15, %cst_9 {dimension_numbers = #tpu.dot_dimension_numbers<[1], [0], [0], [1], [0, 0, 1, 1], [], []>} : vector<8x64xbf16>, vector<64x32xbf16>, vector<8x32xf32> -> vector<8x32xf32>
    %c0_10 = arith.constant 0 : index
    %c0_11 = arith.constant 0 : index
    %17 = vector.load %arg6[%c0_10, %c0_11] : memref<1x32xf32, #tpu.memory_space<vmem>>, vector<1x32xf32>
    %18 = vector.broadcast %17 : vector<1x32xf32> to vector<8x32xf32>
    %19 = arith.addf %16, %18 : vector<8x32xf32>
    %20 = arith.subf %6, %19 : vector<8x32xf32>
    %cst_12 = arith.constant 0.000000e+00 : f32
    %21 = vector.shape_cast %5 : vector<8x1xi1> to vector<8x1xi1>
    %22 = vector.broadcast %21 : vector<8x1xi1> to vector<8x32xi1>
    %23 = vector.broadcast %cst_12 : f32 to vector<8x32xf32>
    %24 = arith.select %22, %20, %23 : vector<8x32xi1>, vector<8x32xf32>
    %c0_13 = arith.constant 0 : index
    %c0_14 = arith.constant 0 : index
    %25 = vector.load %arg7[%c0_13, %c0_14] : memref<8x64xf32, #tpu.memory_space<vmem>>, vector<8x64xf32>
    tpu.vector_store %arg7[%c0_13, %c0_14], %13 {strides = array<i32>} : memref<8x64xf32, #tpu.memory_space<vmem>>, vector<8x64xf32>,
    %26 = arith.mulf %24, %24 : vector<8x32xf32>
    %cst_15 = arith.constant dense<0.000000e+00> : vector<32xf32>
    %27 = vector.multi_reduction <add>, %26, %cst_15 [0] : vector<8x32xf32> to vector<32xf32>
    %28 = vector.shape_cast %27 : vector<32xf32> to vector<1x32xf32>
    %c0_16 = arith.constant 0 : index
    %c0_17 = arith.constant 0 : index
    %29 = vector.load %arg2[%c0_16, %c0_17] : memref<8x32xf32, #tpu.memory_space<vmem>>, vector<8x32xf32>
    %c0_18 = arith.constant 0 : index
    %c0_19 = arith.constant 0 : index
    %30 = vector.load %arg2[%c0_18, %c0_19] : memref<8x32xf32, #tpu.memory_space<vmem>>, vector<8x32xf32>
    %31 = arith.truncf %30 : vector<8x32xf32> to vector<8x32xbf16>
    %c0_20 = arith.constant 0 : index
    %c0_21 = arith.constant 0 : index
    %32 = vector.load %arg3[%c0_20, %c0_21] : memref<32x64xbf16, #tpu.memory_space<vmem>>, vector<32x64xbf16>
    %cst_22 = arith.constant dense<0.000000e+00> : vector<8x64xf32>
    %33 = tpu.matmul %31, %32, %cst_22 {dimension_numbers = #tpu.dot_dimension_numbers<[1], [0], [0], [1], [0, 0, 1, 1], [], []>} : vector<8x32xbf16>, vector<32x64xbf16>, vector<8x64xf32> -> vector<8x64xf32>
    %c0_23 = arith.constant 0 : index
    %c0_24 = arith.constant 0 : index
    %34 = vector.load %arg4[%c0_23, %c0_24] : memref<1x64xf32, #tpu.memory_space<vmem>>, vector<1x64xf32>
    %35 = vector.broadcast %34 : vector<1x64xf32> to vector<8x64xf32>
    %36 = arith.addf %33, %35 : vector<8x64xf32>
    %37 = arith.truncf %36 : vector<8x64xf32> to vector<8x64xbf16>
    %c0_25 = arith.constant 0 : index
    %c0_26 = arith.constant 0 : index
    %38 = vector.load %arg5[%c0_25, %c0_26] : memref<64x32xbf16, #tpu.memory_space<vmem>>, vector<64x32xbf16>
    %cst_27 = arith.constant dense<0.000000e+00> : vector<8x32xf32>
    %39 = tpu.matmul %37, %38, %cst_27 {dimension_numbers = #tpu.dot_dimension_numbers<[1], [0], [0], [1], [0, 0, 1, 1], [], []>} : vector<8x64xbf16>, vector<64x32xbf16>, vector<8x32xf32> -> vector<8x32xf32>
    %c0_28 = arith.constant 0 : index
    %c0_29 = arith.constant 0 : index
    %40 = vector.load %arg6[%c0_28, %c0_29] : memref<1x32xf32, #tpu.memory_space<vmem>>, vector<1x32xf32>
    %41 = vector.broadcast %40 : vector<1x32xf32> to vector<8x32xf32>
    %42 = arith.addf %39, %41 : vector<8x32xf32>
    %43 = arith.subf %29, %42 : vector<8x32xf32>
    %cst_30 = arith.constant 0.000000e+00 : f32
    %44 = vector.shape_cast %5 : vector<8x1xi1> to vector<8x1xi1>
    %45 = vector.broadcast %44 : vector<8x1xi1> to vector<8x32xi1>
    %46 = vector.broadcast %cst_30 : f32 to vector<8x32xf32>
    %47 = arith.select %45, %43, %46 : vector<8x32xi1>, vector<8x32xf32>
    %c0_31 = arith.constant 0 : index
    %c0_32 = arith.constant 0 : index
    %48 = vector.load %arg8[%c0_31, %c0_32] : memref<8x64xf32, #tpu.memory_space<vmem>>, vector<8x64xf32>
    tpu.vector_store %arg8[%c0_31, %c0_32], %36 {strides = array<i32>} : memref<8x64xf32, #tpu.memory_space<vmem>>, vector<8x64xf32>,
    %49 = arith.mulf %47, %47 : vector<8x32xf32>
    %cst_33 = arith.constant dense<0.000000e+00> : vector<32xf32>
    %50 = vector.multi_reduction <add>, %49, %cst_33 [0] : vector<8x32xf32> to vector<32xf32>
    %51 = vector.shape_cast %50 : vector<32xf32> to vector<1x32xf32>
    %52 = arith.addf %28, %51 : vector<1x32xf32>
    %c0_34 = arith.constant 0 : index
    %c0_35 = arith.constant 0 : index
    %c0_36 = arith.constant 0 : index
    %53 = vector.load %arg9[%c0_34, %c0_35, %c0_36] : memref<1x1x32xf32, #tpu.memory_space<vmem>>, vector<1x1x32xf32>
    %54 = vector.shape_cast %53 : vector<1x1x32xf32> to vector<1x32xf32>
    %55 = vector.shape_cast %52 : vector<1x32xf32> to vector<1x1x32xf32>
    tpu.vector_store %arg9[%c0_34, %c0_35, %c0_36], %55 {strides = array<i32>} : memref<1x1x32xf32, #tpu.memory_space<vmem>>, vector<1x1x32xf32>,
    return
  }
  func.func @transform_0(%arg0: i32) -> (i32, i32) {
    %c0_i32 = arith.constant 0 : i32
    %c0_i32_0 = arith.constant 0 : i32
    return %arg0, %c0_i32 : i32, i32
  }
  func.func @transform_1(%arg0: i32) -> (i32, i32) {
    %c0_i32 = arith.constant 0 : i32
    %c0_i32_0 = arith.constant 0 : i32
    return %arg0, %c0_i32 : i32, i32
  }
  func.func @transform_2(%arg0: i32) -> (i32, i32) {
    %c0_i32 = arith.constant 0 : i32
    %c0_i32_0 = arith.constant 0 : i32
    %c0_i32_1 = arith.constant 0 : i32
    return %c0_i32, %c0_i32_0 : i32, i32
  }
  func.func @transform_3(%arg0: i32) -> (i32, i32) {
    %c0_i32 = arith.constant 0 : i32
    %c0_i32_0 = arith.constant 0 : i32
    %c0_i32_1 = arith.constant 0 : i32
    return %c0_i32, %c0_i32_0 : i32, i32
  }
  func.func @transform_4(%arg0: i32) -> (i32, i32) {
    %c0_i32 = arith.constant 0 : i32
    %c0_i32_0 = arith.constant 0 : i32
    %c0_i32_1 = arith.constant 0 : i32
    return %c0_i32, %c0_i32_0 : i32, i32
  }
  func.func @transform_5(%arg0: i32) -> (i32, i32) {
    %c0_i32 = arith.constant 0 : i32
    %c0_i32_0 = arith.constant 0 : i32
    %c0_i32_1 = arith.constant 0 : i32
    return %c0_i32, %c0_i32_0 : i32, i32
  }
  func.func @transform_6(%arg0: i32) -> (i32, i32) {
    %c0_i32 = arith.constant 0 : i32
    %c0_i32_0 = arith.constant 0 : i32
    return %arg0, %c0_i32 : i32, i32
  }
  func.func @transform_7(%arg0: i32) -> (i32, i32) {
    %c0_i32 = arith.constant 0 : i32
    %c0_i32_0 = arith.constant 0 : i32
    return %arg0, %c0_i32 : i32, i32
  }
  func.func @transform_8(%arg0: i32) -> (i32, i32, i32) {
    %c0_i32 = arith.constant 0 : i32
    %c0_i32_0 = arith.constant 0 : i32
    %c0_i32_1 = arith.constant 0 : i32
    return %arg0, %c0_i32, %c0_i32_0 : i32, i32, i32
  }
}

</mosaic_0001>

<llo_original>
// kernel: autoencoder_forward.1
$region0: #{autoencoder_forward.1}
  #allocation0 [shape = 'u32[]', space=smem, size = 0x4, offset = 0x4, fixed_abs, tag = 'smem constant byte address 0x4 - core index']
  #allocation1 [shape = 'u32[144,128]{1,0:T(1,128)}', space=vmem, size = 0x12000, scoped, tag = 'internal scratch']
  %s0 = inlined_call_operand.vmem [shape: f32[21,32], index: 0, kind: input, shape index: {}]
  %s1 = inlined_call_operand.vmem [shape: f32[21,32], index: 1, kind: input, shape index: {}]
  %s2 = inlined_call_operand.vmem [shape: bf16[32,64], index: 2, kind: input, shape index: {}]
  %s3 = inlined_call_operand.vmem [shape: f32[1,64], index: 3, kind: input, shape index: {}]
  %s4 = inlined_call_operand.vmem [shape: bf16[64,32], index: 4, kind: input, shape index: {}]
  %s5 = inlined_call_operand.vmem [shape: f32[1,32], index: 5, kind: input, shape index: {}]
  %s6 = inlined_call_operand.vmem [shape: f32[21,64], index: 6, kind: output, shape index: {0}]
  %s7 = inlined_call_operand.vmem [shape: f32[21,64], index: 7, kind: output, shape index: {1}]
  %s8 = inlined_call_operand.vmem [shape: f32[3,1,32], index: 8, kind: output, shape index: {2}]
  %9 = xla_tuple %s6, %s7, %s8
  %s10 = sld [smem:[#allocation0]]
  $region73: #{autoencoder_forward.1} parent=0
    _
  %s12 = ssub.s32 1, %s10
  %s13 = scalar_select 0, %s12, %s10
  loop: start=0, step=1, limit=5
  $region2: #{autoencoder_forward.1} parent=0 // loop_pre_header
    _
  $region3: #{autoencoder_forward.1} parent=0 // loop_header
    %s15 = sphi 0, %s19
    %p16 = scmp.ge.s32.totalorder %s15, 5
    %s25 = sphi 0, %s27
    %s28 = sphi 0, %s25
    %s29 = sphi 0, %s28
    %s45 = sphi 0, %s29
    %s51 = sphi 0, %s53
    %s54 = sphi 0, %s51
    %s55 = sphi 0, %s54
    %s71 = sphi 0, %s55
    %s75 = sphi 0, %s75
    %s77 = sphi 0, %s75
    %s78 = sphi 0, %s77
    %s92 = sphi 0, %s78
    %s96 = sphi 0, %s96
    %s98 = sphi 0, %s96
    %s99 = sphi 0, %s98
    %s113 = sphi 0, %s99
    %s117 = sphi 0, %s117
    %s119 = sphi 0, %s117
    %s120 = sphi 0, %s119
    %s134 = sphi 0, %s120
    %s138 = sphi 0, %s138
    %s140 = sphi 0, %s138
    %s141 = sphi 0, %s140
    %s155 = sphi 0, %s141
    %s161 = sphi 0, %s163
    %s164 = sphi 0, %s161
    %s165 = sphi 0, %s164
    %s181 = sphi 0, %s165
    %s187 = sphi 0, %s189
    %s190 = sphi 0, %s187
    %s191 = sphi 0, %s190
    %s207 = sphi 0, %s191
    %s213 = sphi 0, %s215
    %s216 = sphi 0, %s213
    %s217 = sphi 0, %s216
    %s233 = sphi 0, %s217
  $region4: #{autoencoder_forward.1} parent=0 // loop_header_branch
    %18 = sbr.rel (%p16) target = $region8
  $region5: #{autoencoder_forward.1} parent=0 // loop_body
    %s20 = ssub.s32 %s15, 1
    %s21 = ssub.s32 %s15, 2
    %s22 = sadd.s32 %s15, 1
    %s23 = ssub.s32 %s15, %s22
    %p24 = scmp.eq.s32.totalorder %s23, 0
    %s26 = sadd.s32 %s25, 1
    %s27 = scalar_select %p24, %s25, %s26
    %p30 = pneg %p24
    %p31 = scmp.eq.s32.totalorder %s15, 2
    %p32 = por %p30, %p31
    %p33 = scmp.ne.s32.totalorder %s25, %s28
    %p34 = scmp.eq.s32.totalorder %s15, 0
    %p35 = por %p33, %p34
    %p36 = scmp.ne.s32.totalorder %s25, %s28
    %p37 = scmp.eq.s32.totalorder %s20, 2
    %p38 = por %p36, %p37
    %p39 = scmp.ne.s32.totalorder %s28, %s29
    %p40 = scmp.eq.s32.totalorder %s20, 0
    %p41 = por %p39, %p40
    %p42 = scmp.ne.s32.totalorder %s28, %s29
    %p43 = scmp.eq.s32.totalorder %s21, 2
    %p44 = por %p42, %p43
    %p46 = scmp.ne.s32.totalorder %s29, %s45
    %p47 = scmp.eq.s32.totalorder %s21, 0
    %p48 = por %p46, %p47
    %s49 = ssub.s32 %s15, %s22
    %p50 = scmp.eq.s32.totalorder %s49, 0
    %s52 = sadd.s32 %s51, 1
    %s53 = scalar_select %p50, %s51, %s52
    %p56 = pneg %p50
    %p57 = scmp.eq.s32.totalorder %s15, 2
    %p58 = por %p56, %p57
    %p59 = scmp.ne.s32.totalorder %s51, %s54
    %p60 = scmp.eq.s32.totalorder %s15, 0
    %p61 = por %p59, %p60
    %p62 = scmp.ne.s32.totalorder %s51, %s54
    %p63 = scmp.eq.s32.totalorder %s20, 2
    %p64 = por %p62, %p63
    %p65 = scmp.ne.s32.totalorder %s54, %s55
    %p66 = scmp.eq.s32.totalorder %s20, 0
    %p67 = por %p65, %p66
    %p68 = scmp.ne.s32.totalorder %s54, %s55
    %p69 = scmp.eq.s32.totalorder %s21, 2
    %p70 = por %p68, %p69
    %p72 = scmp.ne.s32.totalorder %s55, %s71
    %p73 = scmp.eq.s32.totalorder %s21, 0
    %p74 = por %p72, %p73
    %s76 = sadd.s32 %s75, 1
    %p79 = scmp.eq.s32.totalorder %s15, 2
    %p80 = scmp.ne.s32.totalorder %s75, %s77
    %p81 = scmp.eq.s32.totalorder %s15, 0
    %p82 = por %p80, %p81
    %p83 = scmp.ne.s32.totalorder %s75, %s77
    %p84 = scmp.eq.s32.totalorder %s20, 2
    %p85 = por %p83, %p84
    %p86 = scmp.ne.s32.totalorder %s77, %s78
    %p87 = scmp.eq.s32.totalorder %s20, 0
    %p88 = por %p86, %p87
    %p89 = scmp.ne.s32.totalorder %s77, %s78
    %p90 = scmp.eq.s32.totalorder %s21, 2
    %p91 = por %p89, %p90
    %p93 = scmp.ne.s32.totalorder %s78, %s92
    %p94 = scmp.eq.s32.totalorder %s21, 0
    %p95 = por %p93, %p94
    %s97 = sadd.s32 %s96, 1
    %p100 = scmp.eq.s32.totalorder %s15, 2
    %p101 = scmp.ne.s32.totalorder %s96, %s98
    %p102 = scmp.eq.s32.totalorder %s15, 0
    %p103 = por %p101, %p102
    %p104 = scmp.ne.s32.totalorder %s96, %s98
    %p105 = scmp.eq.s32.totalorder %s20, 2
    %p106 = por %p104, %p105
    %p107 = scmp.ne.s32.totalorder %s98, %s99
    %p108 = scmp.eq.s32.totalorder %s20, 0
    %p109 = por %p107, %p108
    %p110 = scmp.ne.s32.totalorder %s98, %s99
    %p111 = scmp.eq.s32.totalorder %s21, 2
    %p112 = por %p110, %p111
    %p114 = scmp.ne.s32.totalorder %s99, %s113
    %p115 = scmp.eq.s32.totalorder %s21, 0
    %p116 = por %p114, %p115
    %s118 = sadd.s32 %s117, 1
    %p121 = scmp.eq.s32.totalorder %s15, 2
    %p122 = scmp.ne.s32.totalorder %s117, %s119
    %p123 = scmp.eq.s32.totalorder %s15, 0
    %p124 = por %p122, %p123
    %p125 = scmp.ne.s32.totalorder %s117, %s119
    %p126 = scmp.eq.s32.totalorder %s20, 2
    %p127 = por %p125, %p126
    %p128 = scmp.ne.s32.totalorder %s119, %s120
    %p129 = scmp.eq.s32.totalorder %s20, 0
    %p130 = por %p128, %p129
    %p131 = scmp.ne.s32.totalorder %s119, %s120
    %p132 = scmp.eq.s32.totalorder %s21, 2
    %p133 = por %p131, %p132
    %p135 = scmp.ne.s32.totalorder %s120, %s134
    %p136 = scmp.eq.s32.totalorder %s21, 0
    %p137 = por %p135, %p136
    %s139 = sadd.s32 %s138, 1
    %p142 = scmp.eq.s32.totalorder %s15, 2
    %p143 = scmp.ne.s32.totalorder %s138, %s140
    %p144 = scmp.eq.s32.totalorder %s15, 0
    %p145 = por %p143, %p144
    %p146 = scmp.ne.s32.totalorder %s138, %s140
    %p147 = scmp.eq.s32.totalorder %s20, 2
    %p148 = por %p146, %p147
    %p149 = scmp.ne.s32.totalorder %s140, %s141
    %p150 = scmp.eq.s32.totalorder %s20, 0
    %p151 = por %p149, %p150
    %p152 = scmp.ne.s32.totalorder %s140, %s141
    %p153 = scmp.eq.s32.totalorder %s21, 2
    %p154 = por %p152, %p153
    %p156 = scmp.ne.s32.totalorder %s141, %s155
    %p157 = scmp.eq.s32.totalorder %s21, 0
    %p158 = por %p156, %p157
    %s159 = ssub.s32 %s15, %s22
    %p160 = scmp.eq.s32.totalorder %s159, 0
    %s162 = sadd.s32 %s161, 1
    %s163 = scalar_select %p160, %s161, %s162
    %p166 = pneg %p160
    %p167 = scmp.eq.s32.totalorder %s15, 2
    %p168 = por %p166, %p167
    %p169 = scmp.ne.s32.totalorder %s161, %s164
    %p170 = scmp.eq.s32.totalorder %s15, 0
    %p171 = por %p169, %p170
    %p172 = scmp.ne.s32.totalorder %s161, %s164
    %p173 = scmp.eq.s32.totalorder %s20, 2
    %p174 = por %p172, %p173
    %p175 = scmp.ne.s32.totalorder %s164, %s165
    %p176 = scmp.eq.s32.totalorder %s20, 0
    %p177 = por %p175, %p176
    %p178 = scmp.ne.s32.totalorder %s164, %s165
    %p179 = scmp.eq.s32.totalorder %s21, 2
    %p180 = por %p178, %p179
    %p182 = scmp.ne.s32.totalorder %s165, %s181
    %p183 = scmp.eq.s32.totalorder %s21, 0
    %p184 = por %p182, %p183
    %s185 = ssub.s32 %s15, %s22
    %p186 = scmp.eq.s32.totalorder %s185, 0
    %s188 = sadd.s32 %s187, 1
    %s189 = scalar_select %p186, %s187, %s188
    %p192 = pneg %p186
    %p193 = scmp.eq.s32.totalorder %s15, 2
    %p194 = por %p192, %p193
    %p195 = scmp.ne.s32.totalorder %s187, %s190
    %p196 = scmp.eq.s32.totalorder %s15, 0
    %p197 = por %p195, %p196
    %p198 = scmp.ne.s32.totalorder %s187, %s190
    %p199 = scmp.eq.s32.totalorder %s20, 2
    %p200 = por %p198, %p199
    %p201 = scmp.ne.s32.totalorder %s190, %s191
    %p202 = scmp.eq.s32.totalorder %s20, 0
    %p203 = por %p201, %p202
    %p204 = scmp.ne.s32.totalorder %s190, %s191
    %p205 = scmp.eq.s32.totalorder %s21, 2
    %p206 = por %p204, %p205
    %p208 = scmp.ne.s32.totalorder %s191, %s207
    %p209 = scmp.eq.s32.totalorder %s21, 0
    %p210 = por %p208, %p209
    %s211 = ssub.s32 %s15, %s22
    %p212 = scmp.eq.s32.totalorder %s211, 0
    %s214 = sadd.s32 %s213, 1
    %s215 = scalar_select %p212, %s213, %s214
    %p218 = pneg %p212
    %p219 = scmp.eq.s32.totalorder %s15, 2
    %p220 = por %p218, %p219
    %p221 = scmp.ne.s32.totalorder %s213, %s216
    %p222 = scmp.eq.s32.totalorder %s15, 0
    %p223 = por %p221, %p222
    %p224 = scmp.ne.s32.totalorder %s213, %s216
    %p225 = scmp.eq.s32.totalorder %s20, 2
    %p226 = por %p224, %p225
    %p227 = scmp.ne.s32.totalorder %s216, %s217
    %p228 = scmp.eq.s32.totalorder %s20, 0
    %p229 = por %p227, %p228
    %p230 = scmp.ne.s32.totalorder %s216, %s217
    %p231 = scmp.eq.s32.totalorder %s21, 2
    %p232 = por %p230, %p231
    %p234 = scmp.ne.s32.totalorder %s217, %s233
    %p235 = scmp.eq.s32.totalorder %s21, 0
    %p236 = por %p234, %p235
    %p237 = scmp.le.s32.totalorder 1, %s15
    %p238 = scmp.lt.s32.totalorder %s15, 4
    %p239 = pnand %p237, %p238
    %p240 = pneg %p239
    // Predicated region
    $region9: #{autoencoder_forward.1} parent=5 // pred_check
      _
    $region10: #{autoencoder_forward.1} parent=5 // pred_check_branch
      %242 = sbr.rel (%p239) target = $region12
    $region11: #{autoencoder_forward.1} parent=5 // pred_region
      %s243 = ssub.s32 %s15, 1
      // Predicated region
      $region13: #{autoencoder_forward.1} parent=11 // pred_check
        %p244 = pneg %p88
      $region14: #{autoencoder_forward.1} parent=11 // pred_check_branch
        %246 = sbr.rel (%p244) target = $region16
      $region15: #{autoencoder_forward.1} parent=11 // pred_region
        _
      $region16: #{autoencoder_forward.1} parent=11 // pred_fallthru
        _
      // Predicated region
      $region17: #{autoencoder_forward.1} parent=11 // pred_check
        %p247 = pneg %p109
      $region18: #{autoencoder_forward.1} parent=11 // pred_check_branch
        %249 = sbr.rel (%p247) target = $region20
      $region19: #{autoencoder_forward.1} parent=11 // pred_region
        _
      $region20: #{autoencoder_forward.1} parent=11 // pred_fallthru
        _
      // Predicated region
      $region21: #{autoencoder_forward.1} parent=11 // pred_check
        %p250 = pneg %p130
      $region22: #{autoencoder_forward.1} parent=11 // pred_check_branch
        %252 = sbr.rel (%p250) target = $region24
      $region23: #{autoencoder_forward.1} parent=11 // pred_region
        _
      $region24: #{autoencoder_forward.1} parent=11 // pred_fallthru
        _
      // Predicated region
      $region25: #{autoencoder_forward.1} parent=11 // pred_check
        %p253 = pneg %p151
      $region26: #{autoencoder_forward.1} parent=11 // pred_check_branch
        %255 = sbr.rel (%p253) target = $region28
      $region27: #{autoencoder_forward.1} parent=11 // pred_region
        _
      $region28: #{autoencoder_forward.1} parent=11 // pred_fallthru
        _
    $region12: #{autoencoder_forward.1} parent=5 // pred_fallthru
      _
    %p256 = scmp.lt.s32.totalorder %s15, 3
    // Predicated region
    $region29: #{autoencoder_forward.1} parent=5 // pred_check
      %p257 = pneg %p256
    $region30: #{autoencoder_forward.1} parent=5 // pred_check_branch
      %259 = sbr.rel (%p257) target = $region32
    $region31: #{autoencoder_forward.1} parent=5 // pred_region
      // Predicated region
      $region33: #{autoencoder_forward.1} parent=31 // pred_check
        %p260 = pneg %p35
      $region34: #{autoencoder_forward.1} parent=31 // pred_check_branch
        %262 = sbr.rel (%p260) target = $region36
      $region35: #{autoencoder_forward.1} parent=31 // pred_region
        %p263 = scmp.lt.s32.totalorder %s15, 2
        %s264 = scalar_select %p263, %s15, 2
        %s265 = smul.addr %s264, 8
        %s266 = scalar_lea.vmem %s0, %s265
      $region36: #{autoencoder_forward.1} parent=31 // pred_fallthru
        _
      // Predicated region
      $region37: #{autoencoder_forward.1} parent=31 // pred_check
        %p267 = pneg %p61
      $region38: #{autoencoder_forward.1} parent=31 // pred_check_branch
        %269 = sbr.rel (%p267) target = $region40
      $region39: #{autoencoder_forward.1} parent=31 // pred_region
        %p270 = scmp.lt.s32.totalorder %s15, 2
        %s271 = scalar_select %p270, %s15, 2
        %s272 = smul.addr %s271, 8
        %s273 = scalar_lea.vmem %s1, %s272
      $region40: #{autoencoder_forward.1} parent=31 // pred_fallthru
        _
    $region32: #{autoencoder_forward.1} parent=5 // pred_fallthru
      _
    %p274 = scmp.le.s32.totalorder 1, %s15
    %p275 = scmp.lt.s32.totalorder %s15, 4
    %p276 = pnand %p274, %p275
    %p277 = pneg %p276
    // Predicated region
    $region41: #{autoencoder_forward.1} parent=5 // pred_check
      _
    $region42: #{autoencoder_forward.1} parent=5 // pred_check_branch
      %279 = sbr.rel (%p276) target = $region44
    $region43: #{autoencoder_forward.1} parent=5 // pred_region
      %s280 = ssub.s32 %s15, 1
      %p281 = scmp.lt.s32.totalorder %s20, 2
      %s282 = scalar_select %p281, %s20, 2
      %s283 = smul.addr %s282, 8
      %s284 = scalar_lea.vmem %s0, %s283
      %p285 = pneg %p41
      %p286 = pneg %p38
      %p287 = scmp.lt.s32.totalorder %s20, 2
      %s288 = scalar_select %p287, %s20, 2
      %s289 = smul.addr %s288, 8
      %s290 = scalar_lea.vmem %s1, %s289
      %p291 = pneg %p67
      %p292 = pneg %p64
      %p293 = pneg %p88
      %p294 = pneg %p85
      %p295 = pneg %p109
      %p296 = pneg %p106
      %p297 = pneg %p130
      %p298 = pneg %p127
      %p299 = pneg %p151
      %p300 = pneg %p148
      %p301 = pneg %p177
      %p302 = pneg %p174
      %p303 = scmp.lt.s32.totalorder %s20, 2
      %s304 = scalar_select %p303, %s20, 2
      %s305 = smul.addr %s304, 8
      %s306 = scalar_lea.vmem %s6, %s305
      %p307 = pneg %p203
      %p308 = pneg %p200
      %p309 = scmp.lt.s32.totalorder %s20, 2
      %s310 = scalar_select %p309, %s20, 2
      %s311 = smul.addr %s310, 8
      %s312 = scalar_lea.vmem %s7, %s311
      %p313 = pneg %p229
      %p314 = pneg %p226
      %p315 = scmp.lt.s32.totalorder %s20, 2
      %s316 = scalar_select %p315, %s20, 2
      %s317 = scalar_lea.vmem %s8, %s316
      %p318 = scmp.lt.s32.totalorder %s20, 2
      %s319 = scalar_select %p318, %s20, 2
      %s320 = smul.addr %s319, 8
      %s321 = scalar_lea.vmem %s0, %s320
      %p322 = scmp.lt.s32.totalorder %s20, 2
      %s323 = scalar_select %p322, %s20, 2
      %s324 = smul.addr %s323, 8
      %s325 = scalar_lea.vmem %s1, %s324
      %p326 = scmp.lt.s32.totalorder %s20, 2
      %s327 = scalar_select %p326, %s20, 2
      %s328 = smul.addr %s327, 8
      %s329 = scalar_lea.vmem %s6, %s328
      %p330 = scmp.lt.s32.totalorder %s20, 2
      %s331 = scalar_select %p330, %s20, 2
      %s332 = smul.addr %s331, 8
      %s333 = scalar_lea.vmem %s7, %s332
      %p334 = scmp.lt.s32.totalorder %s20, 2
      %s335 = scalar_select %p334, %s20, 2
      %s336 = scalar_lea.vmem %s8, %s335
      %v338 = vlaneseq
      %v339 = vshrl.u32 %v338, 7
      %s340 = smul.u32 %s20, 8
      %v341 = vstv %s340
      %v342 = vadd.s32 %v339, %v341
      %vm343 = vcmp.lt.s32.totalorder %v342, 21
      %v344 = vld [vmem:[%s321] sm:$0xff]
      %v345 = vpack.c.bf16 %v344, %v344
      %v346 = vld [vmem:[%s2] sm:$0xf]
      %v347 = vld [vmem:[%s2 + $0x4] sm:$0xf]
      %v348 = vld [vmem:[%s2 + $0x8] sm:$0xf]
      %v349 = vld [vmem:[%s2 + $0xc] sm:$0xf]
      %v350 = vld [vmem:[%s3] sm:$0x1]
      %v352 = vlaneseq
      %v353 = vshrl.u32 %v352, 7
      %v354 = vsub.s32 0, %v353
      %v355 = vrot.slane %v350, %v354
      %v361 = vunpack.c.l.b16 %v346
      %v362 = vunpack.c.l.b16 %v347
      %v363 = vunpack.c.l.b16 %v348
      %v364 = vunpack.c.l.b16 %v349
      %v365 = vpack.c.b16 %v362, %v361
      %v366 = vpack.c.b16 %v364, %v363
      %vm369 = vcmask 261120
      %v371 = vsel %vm369, %v345, 0
      %373 = vmatprep.subr.bf16.mxu0 0
      %374 = vmatpush1.bf16.msra.mxu0 %v365
      %375 = vmatprep.subr.bf16.mxu0 0
      %376 = vmatpush1.bf16.msra.mxu0 %v366
      %377 = vmatprep.subr.bf16.mxu0 0
      %378 = vmatpush1.bf16.msra.mxu0 0
      %379 = vmatprep.subr.bf16.mxu0 0
      %380 = vmatpush1.bf16.msra.mxu0 0
      %381 = vmatprep.subr.bf16.mxu0 0
      %382 = vmatpush1.bf16.msra.mxu0 0
      %383 = vmatprep.subr.bf16.mxu0 0
      %384 = vmatpush1.bf16.msra.mxu0 0
      %385 = vmatprep.subr.bf16.mxu0 0
      %386 = vmatpush1.bf16.msra.mxu0 0
      %387 = vmatprep.subr.bf16.mxu0 0
      %388 = vmatpush1.bf16.msra.mxu0 0
      %389 = vmatprep.subr.bf16.mxu0 0
      %390 = vmatpush1.bf16.msra.mxu0 0
      %391 = vmatprep.subr.bf16.mxu0 0
      %392 = vmatpush1.bf16.msra.mxu0 0
      %393 = vmatprep.subr.bf16.mxu0 0
      %394 = vmatpush1.bf16.msra.mxu0 0
      %395 = vmatprep.subr.bf16.mxu0 0
      %396 = vmatpush1.bf16.msra.mxu0 0
      %397 = vmatprep.subr.bf16.mxu0 0
      %398 = vmatpush1.bf16.msra.mxu0 0
      %399 = vmatprep.subr.bf16.mxu0 0
      %400 = vmatpush1.bf16.msra.mxu0 0
      %401 = vmatprep.subr.bf16.mxu0 0
      %402 = vmatpush1.bf16.msra.mxu0 0
      %403 = vmatprep.subr.bf16.mxu0 0
      %404 = vmatpush1.bf16.msra.mxu0 0
      %405 = vmatprep.mubr.bf16.mxu0 0
      %406 = vmatmul.mubr.bf16.gmra.mrb[0].mxu0 %v371
      %v407 = vpop.f32.mrb[0].mxu0
      %v408 = vadd.f32 %v355, %v407
      %v409 = vpop.f32.mrb[0].mxu0
      %v410 = vpop.f32.mrb[0].mxu0
      %v411 = vpop.f32.mrb[0].mxu0
      %412 = vdwg.mxu0
      %v413 = vpack.c.bf16 %v408, %v408
      %v414 = vld [vmem:[%s4] sm:$0xf]
      %v415 = vld [vmem:[%s4 + $0x4] sm:$0xf]
      %v416 = vld [vmem:[%s4 + $0x8] sm:$0xf]
      %v417 = vld [vmem:[%s4 + $0xc] sm:$0xf]
      %v418 = vld [vmem:[%s4 + $0x10] sm:$0xf]
      %v419 = vld [vmem:[%s4 + $0x14] sm:$0xf]
      %v420 = vld [vmem:[%s4 + $0x18] sm:$0xf]
      %v421 = vld [vmem:[%s4 + $0x1c] sm:$0xf]
      %v422 = vld [vmem:[%s5] sm:$0x1]
      %v424 = vlaneseq
      %v425 = vshrl.u32 %v424, 7
      %v426 = vsub.s32 0, %v425
      %v427 = vrot.slane %v422, %v426
      %v437 = vunpack.c.l.b16 %v414
      %v438 = vunpack.c.l.b16 %v415
      %v439 = vunpack.c.l.b16 %v416
      %v440 = vunpack.c.l.b16 %v417
      %v441 = vunpack.c.l.b16 %v418
      %v442 = vunpack.c.l.b16 %v419
      %v443 = vunpack.c.l.b16 %v420
      %v444 = vunpack.c.l.b16 %v421
      %v445 = vpack.c.b16 %v438, %v437
      %v446 = vpack.c.b16 %v440, %v439
      %v447 = vpack.c.b16 %v442, %v441
      %v448 = vpack.c.b16 %v444, %v443
      %vm453 = vcmask 523264
      %v455 = vsel %vm453, %v413, 0
      %457 = vmatprep.subr.bf16.mxu0 0
      %458 = vmatpush1.bf16.msra.mxu0 %v445
      %459 = vmatprep.subr.bf16.mxu0 0
      %460 = vmatpush1.bf16.msra.mxu0 %v446
      %461 = vmatprep.subr.bf16.mxu0 0
      %462 = vmatpush1.bf16.msra.mxu0 %v447
      %463 = vmatprep.subr.bf16.mxu0 0
      %464 = vmatpush1.bf16.msra.mxu0 %v448
      %465 = vmatprep.subr.bf16.mxu0 0
      %466 = vmatpush1.bf16.msra.mxu0 0
      %467 = vmatprep.subr.bf16.mxu0 0
      %468 = vmatpush1.bf16.msra.mxu0 0
      %469 = vmatprep.subr.bf16.mxu0 0
      %470 = vmatpush1.bf16.msra.mxu0 0
      %471 = vmatprep.subr.bf16.mxu0 0
      %472 = vmatpush1.bf16.msra.mxu0 0
      %473 = vmatprep.subr.bf16.mxu0 0
      %474 = vmatpush1.bf16.msra.mxu0 0
      %475 = vmatprep.subr.bf16.mxu0 0
      %476 = vmatpush1.bf16.msra.mxu0 0
      %477 = vmatprep.subr.bf16.mxu0 0
      %478 = vmatpush1.bf16.msra.mxu0 0
      %479 = vmatprep.subr.bf16.mxu0 0
      %480 = vmatpush1.bf16.msra.mxu0 0
      %481 = vmatprep.subr.bf16.mxu0 0
      %482 = vmatpush1.bf16.msra.mxu0 0
      %483 = vmatprep.subr.bf16.mxu0 0
      %484 = vmatpush1.bf16.msra.mxu0 0
      %485 = vmatprep.subr.bf16.mxu0 0
      %486 = vmatpush1.bf16.msra.mxu0 0
      %487 = vmatprep.subr.bf16.mxu0 0
      %488 = vmatpush1.bf16.msra.mxu0 0
      %489 = vmatprep.mubr.bf16.mxu0 0
      %490 = vmatmul.mubr.bf16.gmra.mrb[0].mxu0 %v455
      %v491 = vpop.f32.mrb[0].mxu0
      %v492 = vadd.f32 %v427, %v491
      %v493 = vpop.f32.mrb[0].mxu0
      %v494 = vpop.f32.mrb[0].mxu0
      %v495 = vpop.f32.mrb[0].mxu0
      %496 = vdwg.mxu0
      %v497 = vsub.f32 %v344, %v492
      %v498 = vsel %vm343, 1, 0
      %vm499 = vcmp.eq.s32.totalorder %v498, 1
      %v500 = vsel %vm499, %v497, 0.0
      %501 = vst.msk [vmem:[%s329] sm:$0xff] %vm453, %v408
      %v502 = vmul.f32 %v500, %v500
      %v503 = vsel %vm369, %v502, 0.0
      %v504 = vrot.slane %v503, 4
      %v505 = vadd.f32 %v503, %v504
      %v506 = vrot.slane %v505, 2
      %v507 = vadd.f32 %v505, %v506
      %v508 = vrot.slane %v507, 1
      %v509 = vadd.f32 %v507, %v508
      %v510 = vld [vmem:[%s325] sm:$0xff]
      %v511 = vpack.c.bf16 %v510, %v510
      %v512 = vld [vmem:[%s2] sm:$0xf]
      %v513 = vld [vmem:[%s2 + $0x4] sm:$0xf]
      %v514 = vld [vmem:[%s2 + $0x8] sm:$0xf]
      %v515 = vld [vmem:[%s2 + $0xc] sm:$0xf]
      %v516 = vld [vmem:[%s3] sm:$0x1]
      %v518 = vlaneseq
      %v519 = vshrl.u32 %v518, 7
      %v520 = vsub.s32 0, %v519
      %v521 = vrot.slane %v516, %v520
      %v527 = vunpack.c.l.b16 %v512
      %v528 = vunpack.c.l.b16 %v513
      %v529 = vunpack.c.l.b16 %v514
      %v530 = vunpack.c.l.b16 %v515
      %v531 = vpack.c.b16 %v528, %v527
      %v532 = vpack.c.b16 %v530, %v529
      %v536 = vsel %vm369, %v511, 0
      %538 = vmatprep.subr.bf16.mxu0 0
      %539 = vmatpush1.bf16.msra.mxu0 %v531
      %540 = vmatprep.subr.bf16.mxu0 0
      %541 = vmatpush1.bf16.msra.mxu0 %v532
      %542 = vmatprep.subr.bf16.mxu0 0
      %543 = vmatpush1.bf16.msra.mxu0 0
      %544 = vmatprep.subr.bf16.mxu0 0
      %545 = vmatpush1.bf16.msra.mxu0 0
      %546 = vmatprep.subr.bf16.mxu0 0
      %547 = vmatpush1.bf16.msra.mxu0 0
      %548 = vmatprep.subr.bf16.mxu0 0
      %549 = vmatpush1.bf16.msra.mxu0 0
      %550 = vmatprep.subr.bf16.mxu0 0
      %551 = vmatpush1.bf16.msra.mxu0 0
      %552 = vmatprep.subr.bf16.mxu0 0
      %553 = vmatpush1.bf16.msra.mxu0 0
      %554 = vmatprep.subr.bf16.mxu0 0
      %555 = vmatpush1.bf16.msra.mxu0 0
      %556 = vmatprep.subr.bf16.mxu0 0
      %557 = vmatpush1.bf16.msra.mxu0 0
      %558 = vmatprep.subr.bf16.mxu0 0
      %559 = vmatpush1.bf16.msra.mxu0 0
      %560 = vmatprep.subr.bf16.mxu0 0
      %561 = vmatpush1.bf16.msra.mxu0 0
      %562 = vmatprep.subr.bf16.mxu0 0
      %563 = vmatpush1.bf16.msra.mxu0 0
      %564 = vmatprep.subr.bf16.mxu0 0
      %565 = vmatpush1.bf16.msra.mxu0 0
      %566 = vmatprep.subr.bf16.mxu0 0
      %567 = vmatpush1.bf16.msra.mxu0 0
      %568 = vmatprep.subr.bf16.mxu0 0
      %569 = vmatpush1.bf16.msra.mxu0 0
      %570 = vmatprep.mubr.bf16.mxu0 0
      %571 = vmatmul.mubr.bf16.gmra.mrb[0].mxu0 %v536
      %v572 = vpop.f32.mrb[0].mxu0
      %v573 = vadd.f32 %v521, %v572
      %v574 = vpop.f32.mrb[0].mxu0
      %v575 = vpop.f32.mrb[0].mxu0
      %v576 = vpop.f32.mrb[0].mxu0
      %577 = vdwg.mxu0
      %v578 = vpack.c.bf16 %v573, %v573
      %v579 = vld [vmem:[%s4] sm:$0xf]
      %v580 = vld [vmem:[%s4 + $0x4] sm:$0xf]
      %v581 = vld [vmem:[%s4 + $0x8] sm:$0xf]
      %v582 = vld [vmem:[%s4 + $0xc] sm:$0xf]
      %v583 = vld [vmem:[%s4 + $0x10] sm:$0xf]
      %v584 = vld [vmem:[%s4 + $0x14] sm:$0xf]
      %v585 = vld [vmem:[%s4 + $0x18] sm:$0xf]
      %v586 = vld [vmem:[%s4 + $0x1c] sm:$0xf]
      %v587 = vld [vmem:[%s5] sm:$0x1]
      %v589 = vlaneseq
      %v590 = vshrl.u32 %v589, 7
      %v591 = vsub.s32 0, %v590
      %v592 = vrot.slane %v587, %v591
      %v602 = vunpack.c.l.b16 %v579
      %v603 = vunpack.c.l.b16 %v580
      %v604 = vunpack.c.l.b16 %v581
      %v605 = vunpack.c.l.b16 %v582
      %v606 = vunpack.c.l.b16 %v583
      %v607 = vunpack.c.l.b16 %v584
      %v608 = vunpack.c.l.b16 %v585
      %v609 = vunpack.c.l.b16 %v586
      %v610 = vpack.c.b16 %v603, %v602
      %v611 = vpack.c.b16 %v605, %v604
      %v612 = vpack.c.b16 %v607, %v606
      %v613 = vpack.c.b16 %v609, %v608
      %v619 = vsel %vm453, %v578, 0
      %621 = vmatprep.subr.bf16.mxu0 0
      %622 = vmatpush1.bf16.msra.mxu0 %v610
      %623 = vmatprep.subr.bf16.mxu0 0
      %624 = vmatpush1.bf16.msra.mxu0 %v611
      %625 = vmatprep.subr.bf16.mxu0 0
      %626 = vmatpush1.bf16.msra.mxu0 %v612
      %627 = vmatprep.subr.bf16.mxu0 0
      %628 = vmatpush1.bf16.msra.mxu0 %v613
      %629 = vmatprep.subr.bf16.mxu0 0
      %630 = vmatpush1.bf16.msra.mxu0 0
      %631 = vmatprep.subr.bf16.mxu0 0
      %632 = vmatpush1.bf16.msra.mxu0 0
      %633 = vmatprep.subr.bf16.mxu0 0
      %634 = vmatpush1.bf16.msra.mxu0 0
      %635 = vmatprep.subr.bf16.mxu0 0
      %636 = vmatpush1.bf16.msra.mxu0 0
      %637 = vmatprep.subr.bf16.mxu0 0
      %638 = vmatpush1.bf16.msra.mxu0 0
      %639 = vmatprep.subr.bf16.mxu0 0
      %640 = vmatpush1.bf16.msra.mxu0 0
      %641 = vmatprep.subr.bf16.mxu0 0
      %642 = vmatpush1.bf16.msra.mxu0 0
      %643 = vmatprep.subr.bf16.mxu0 0
      %644 = vmatpush1.bf16.msra.mxu0 0
      %645 = vmatprep.subr.bf16.mxu0 0
      %646 = vmatpush1.bf16.msra.mxu0 0
      %647 = vmatprep.subr.bf16.mxu0 0
      %648 = vmatpush1.bf16.msra.mxu0 0
      %649 = vmatprep.subr.bf16.mxu0 0
      %650 = vmatpush1.bf16.msra.mxu0 0
      %651 = vmatprep.subr.bf16.mxu0 0
      %652 = vmatpush1.bf16.msra.mxu0 0
      %653 = vmatprep.mubr.bf16.mxu0 0
      %654 = vmatmul.mubr.bf16.gmra.mrb[0].mxu0 %v619
      %v655 = vpop.f32.mrb[0].mxu0
      %v656 = vadd.f32 %v592, %v655
      %v657 = vpop.f32.mrb[0].mxu0
      %v658 = vpop.f32.mrb[0].mxu0
      %v659 = vpop.f32.mrb[0].mxu0
      %660 = vdwg.mxu0
      %v661 = vsub.f32 %v510, %v656
      %v662 = vsel %vm499, %v661, 0.0
      %663 = vst.msk [vmem:[%s333] sm:$0xff] %vm453, %v573
      %v664 = vmul.f32 %v662, %v662
      %v665 = vsel %vm369, %v664, 0.0
      %v666 = vrot.slane %v665, 4
      %v667 = vadd.f32 %v665, %v666
      %v668 = vrot.slane %v667, 2
      %v669 = vadd.f32 %v667, %v668
      %v670 = vrot.slane %v669, 1
      %v671 = vadd.f32 %v669, %v670
      %v672 = vadd.f32 %v509, %v671
      %vm673 = vcmask 253952
      %674 = vst.msk [vmem:[%s336] sm:$0x1] %vm673, %v672
      %p675 = scmp.lt.s32.totalorder %s20, 2
      %s676 = scalar_select %p675, %s20, 2
      %s677 = smul.addr %s676, 8
      %s678 = scalar_lea.vmem %s6, %s677
      %p679 = scmp.lt.s32.totalorder %s20, 2
      %s680 = scalar_select %p679, %s20, 2
      %s681 = smul.addr %s680, 8
      %s682 = scalar_lea.vmem %s7, %s681
      %p683 = scmp.lt.s32.totalorder %s20, 2
      %s684 = scalar_select %p683, %s20, 2
      %s685 = scalar_lea.vmem %s8, %s684
      // Predicated region
      $region45: #{autoencoder_forward.1} parent=43 // pred_check
        %p686 = pneg %p174
      $region46: #{autoencoder_forward.1} parent=43 // pred_check_branch
        %688 = sbr.rel (%p686) target = $region48
      $region47: #{autoencoder_forward.1} parent=43 // pred_region
        _
      $region48: #{autoencoder_forward.1} parent=43 // pred_fallthru
        _
      // Predicated region
      $region49: #{autoencoder_forward.1} parent=43 // pred_check
        %p689 = pneg %p200
      $region50: #{autoencoder_forward.1} parent=43 // pred_check_branch
        %691 = sbr.rel (%p689) target = $region52
      $region51: #{autoencoder_forward.1} parent=43 // pred_region
        _
      $region52: #{autoencoder_forward.1} parent=43 // pred_fallthru
        _
      // Predicated region
      $region53: #{autoencoder_forward.1} parent=43 // pred_check
        %p692 = pneg %p226
      $region54: #{autoencoder_forward.1} parent=43 // pred_check_branch
        %694 = sbr.rel (%p692) target = $region56
      $region55: #{autoencoder_forward.1} parent=43 // pred_region
        _
      $region56: #{autoencoder_forward.1} parent=43 // pred_fallthru
        _
    $region44: #{autoencoder_forward.1} parent=5 // pred_fallthru
      _
    %p695 = scmp.le.s32.totalorder 2, %s15
    // Predicated region
    $region57: #{autoencoder_forward.1} parent=5 // pred_check
      %p696 = pneg %p695
    $region58: #{autoencoder_forward.1} parent=5 // pred_check_branch
      %698 = sbr.rel (%p696) target = $region60
    $region59: #{autoencoder_forward.1} parent=5 // pred_region
      %s699 = ssub.s32 %s15, 2
      // Predicated region
      $region61: #{autoencoder_forward.1} parent=59 // pred_check
        %p700 = pneg %p180
      $region62: #{autoencoder_forward.1} parent=59 // pred_check_branch
        %702 = sbr.rel (%p700) target = $region64
      $region63: #{autoencoder_forward.1} parent=59 // pred_region
        %p703 = scmp.lt.s32.totalorder %s21, 2
        %s704 = scalar_select %p703, %s21, 2
        %s705 = smul.addr %s704, 8
        %s706 = scalar_lea.vmem %s6, %s705
      $region64: #{autoencoder_forward.1} parent=59 // pred_fallthru
        _
      // Predicated region
      $region65: #{autoencoder_forward.1} parent=59 // pred_check
        %p707 = pneg %p206
      $region66: #{autoencoder_forward.1} parent=59 // pred_check_branch
        %709 = sbr.rel (%p707) target = $region68
      $region67: #{autoencoder_forward.1} parent=59 // pred_region
        %p710 = scmp.lt.s32.totalorder %s21, 2
        %s711 = scalar_select %p710, %s21, 2
        %s712 = smul.addr %s711, 8
        %s713 = scalar_lea.vmem %s7, %s712
      $region68: #{autoencoder_forward.1} parent=59 // pred_fallthru
        _
      // Predicated region
      $region69: #{autoencoder_forward.1} parent=59 // pred_check
        %p714 = pneg %p232
      $region70: #{autoencoder_forward.1} parent=59 // pred_check_branch
        %716 = sbr.rel (%p714) target = $region72
      $region71: #{autoencoder_forward.1} parent=59 // pred_region
        %p717 = scmp.lt.s32.totalorder %s21, 2
        %s718 = scalar_select %p717, %s21, 2
        %s719 = scalar_lea.vmem %s8, %s718
      $region72: #{autoencoder_forward.1} parent=59 // pred_fallthru
        _
    $region60: #{autoencoder_forward.1} parent=5 // pred_fallthru
      _
  $region6: #{autoencoder_forward.1} parent=0 // loop_footer
    %s19 = sadd.s32 1, %s15
  $region7: #{autoencoder_forward.1} parent=0 // loop_footer_branch
    %14 = sbr.rel target = $region3
  $region8: #{autoencoder_forward.1} parent=0 // loop_exit
    _

// kernel: autoencoder_forward.1
$region0: #{autoencoder_forward.1}
  #allocation0 [shape = 'u32[]', space=smem, size = 0x4, offset = 0x4, fixed_abs, tag = 'smem constant byte address 0x4 - core index']
  #allocation1 [shape = 'u32[144,128]{1,0:T(1,128)}', space=vmem, size = 0x12000, scoped, tag = 'internal scratch']
  %s0 = inlined_call_operand.vmem [shape: f32[21,32], index: 0, kind: input, shape index: {}]
  %s1 = inlined_call_operand.vmem [shape: f32[21,32], index: 1, kind: input, shape index: {}]
  %s2 = inlined_call_operand.vmem [shape: bf16[32,64], index: 2, kind: input, shape index: {}]
  %s3 = inlined_call_operand.vmem [shape: f32[1,64], index: 3, kind: input, shape index: {}]
  %s4 = inlined_call_operand.vmem [shape: bf16[64,32], index: 4, kind: input, shape index: {}]
  %s5 = inlined_call_operand.vmem [shape: f32[1,32], index: 5, kind: input, shape index: {}]
  %s6 = inlined_call_operand.vmem [shape: f32[21,64], index: 6, kind: output, shape index: {0}]
  %s7 = inlined_call_operand.vmem [shape: f32[21,64], index: 7, kind: output, shape index: {1}]
  %s8 = inlined_call_operand.vmem [shape: f32[3,1,32], index: 8, kind: output, shape index: {2}]
  %9 = xla_tuple %s6, %s7, %s8
  %s10 = sld [smem:[#allocation0]]
  $region73: #{autoencoder_forward.1} parent=0
    _
  %s12 = ssub.s32 1, %s10
  %s13 = scalar_select 0, %s12, %s10
  loop: start=0, step=1, limit=5
  $region2: #{autoencoder_forward.1} parent=0 // loop_pre_header
    _
  $region3: #{autoencoder_forward.1} parent=0 // loop_header
    %s15 = sphi 0, %s19
    %p16 = scmp.ge.s32.totalorder %s15, 5
    %s25 = sphi 0, %s27
    %s28 = sphi 0, %s25
    %s29 = sphi 0, %s28
    %s45 = sphi 0, %s29
    %s51 = sphi 0, %s53
    %s54 = sphi 0, %s51
    %s55 = sphi 0, %s54
    %s71 = sphi 0, %s55
    %s75 = sphi 0, %s75
    %s77 = sphi 0, %s75
    %s78 = sphi 0, %s77
    %s92 = sphi 0, %s78
    %s96 = sphi 0, %s96
    %s98 = sphi 0, %s96
    %s99 = sphi 0, %s98
    %s113 = sphi 0, %s99
    %s117 = sphi 0, %s117
    %s119 = sphi 0, %s117
    %s120 = sphi 0, %s119
    %s134 = sphi 0, %s120
    %s138 = sphi 0, %s138
    %s140 = sphi 0, %s138
    %s141 = sphi 0, %s140
    %s155 = sphi 0, %s141
    %s161 = sphi 0, %s163
    %s164 = sphi 0, %s161
    %s165 = sphi 0, %s164
    %s181 = sphi 0, %s165
    %s187 = sphi 0, %s189
    %s190 = sphi 0, %s187
    %s191 = sphi 0, %s190
    %s207 = sphi 0, %s191
    %s213 = sphi 0, %s215
    %s216 = sphi 0, %s213
    %s217 = sphi 0, %s216
    %s233 = sphi 0, %s217
  $region4: #{autoencoder_forward.1} parent=0 // loop_header_branch
    %18 = sbr.rel (%p16) target = $region8
  $region5: #{autoencoder_forward.1} parent=0 // loop_body
    %s20 = ssub.s32 %s15, 1
    %s21 = ssub.s32 %s15, 2
    %s22 = sadd.s32 %s15, 1
    %s23 = ssub.s32 %s15, %s22
    %p24 = scmp.eq.s32.totalorder %s23, 0
    %s26 = sadd.s32 %s25, 1
    %s27 = scalar_select %p24, %s25, %s26
    %p30 = pneg %p24
    %p31 = scmp.eq.s32.totalorder %s15, 2
    %p32 = por %p30, %p31
    %p33 = scmp.ne.s32.totalorder %s25, %s28
    %p34 = scmp.eq.s32.totalorder %s15, 0
    %p35 = por %p33, %p34
    %p36 = scmp.ne.s32.totalorder %s25, %s28
    %p37 = scmp.eq.s32.totalorder %s20, 2
    %p38 = por %p36, %p37
    %p39 = scmp.ne.s32.totalorder %s28, %s29
    %p40 = scmp.eq.s32.totalorder %s20, 0
    %p41 = por %p39, %p40
    %p42 = scmp.ne.s32.totalorder %s28, %s29
    %p43 = scmp.eq.s32.totalorder %s21, 2
    %p44 = por %p42, %p43
    %p46 = scmp.ne.s32.totalorder %s29, %s45
    %p47 = scmp.eq.s32.totalorder %s21, 0
    %p48 = por %p46, %p47
    %s49 = ssub.s32 %s15, %s22
    %p50 = scmp.eq.s32.totalorder %s49, 0
    %s52 = sadd.s32 %s51, 1
    %s53 = scalar_select %p50, %s51, %s52
    %p56 = pneg %p50
    %p57 = scmp.eq.s32.totalorder %s15, 2
    %p58 = por %p56, %p57
    %p59 = scmp.ne.s32.totalorder %s51, %s54
    %p60 = scmp.eq.s32.totalorder %s15, 0
    %p61 = por %p59, %p60
    %p62 = scmp.ne.s32.totalorder %s51, %s54
    %p63 = scmp.eq.s32.totalorder %s20, 2
    %p64 = por %p62, %p63
    %p65 = scmp.ne.s32.totalorder %s54, %s55
    %p66 = scmp.eq.s32.totalorder %s20, 0
    %p67 = por %p65, %p66
    %p68 = scmp.ne.s32.totalorder %s54, %s55
    %p69 = scmp.eq.s32.totalorder %s21, 2
    %p70 = por %p68, %p69
    %p72 = scmp.ne.s32.totalorder %s55, %s71
    %p73 = scmp.eq.s32.totalorder %s21, 0
    %p74 = por %p72, %p73
    %s76 = sadd.s32 %s75, 1
    %p79 = scmp.eq.s32.totalorder %s15, 2
    %p80 = scmp.ne.s32.totalorder %s75, %s77
    %p81 = scmp.eq.s32.totalorder %s15, 0
    %p82 = por %p80, %p81
    %p83 = scmp.ne.s32.totalorder %s75, %s77
    %p84 = scmp.eq.s32.totalorder %s20, 2
    %p85 = por %p83, %p84
    %p86 = scmp.ne.s32.totalorder %s77, %s78
    %p87 = scmp.eq.s32.totalorder %s20, 0
    %p88 = por %p86, %p87
    %p89 = scmp.ne.s32.totalorder %s77, %s78
    %p90 = scmp.eq.s32.totalorder %s21, 2
    %p91 = por %p89, %p90
    %p93 = scmp.ne.s32.totalorder %s78, %s92
    %p94 = scmp.eq.s32.totalorder %s21, 0
    %p95 = por %p93, %p94
    %s97 = sadd.s32 %s96, 1
    %p100 = scmp.eq.s32.totalorder %s15, 2
    %p101 = scmp.ne.s32.totalorder %s96, %s98
    %p102 = scmp.eq.s32.totalorder %s15, 0
    %p103 = por %p101, %p102
    %p104 = scmp.ne.s32.totalorder %s96, %s98
    %p105 = scmp.eq.s32.totalorder %s20, 2
    %p106 = por %p104, %p105
    %p107 = scmp.ne.s32.totalorder %s98, %s99
    %p108 = scmp.eq.s32.totalorder %s20, 0
    %p109 = por %p107, %p108
    %p110 = scmp.ne.s32.totalorder %s98, %s99
    %p111 = scmp.eq.s32.totalorder %s21, 2
    %p112 = por %p110, %p111
    %p114 = scmp.ne.s32.totalorder %s99, %s113
    %p115 = scmp.eq.s32.totalorder %s21, 0
    %p116 = por %p114, %p115
    %s118 = sadd.s32 %s117, 1
    %p121 = scmp.eq.s32.totalorder %s15, 2
    %p122 = scmp.ne.s32.totalorder %s117, %s119
    %p123 = scmp.eq.s32.totalorder %s15, 0
    %p124 = por %p122, %p123
    %p125 = scmp.ne.s32.totalorder %s117, %s119
    %p126 = scmp.eq.s32.totalorder %s20, 2
    %p127 = por %p125, %p126
    %p128 = scmp.ne.s32.totalorder %s119, %s120
    %p129 = scmp.eq.s32.totalorder %s20, 0
    %p130 = por %p128, %p129
    %p131 = scmp.ne.s32.totalorder %s119, %s120
    %p132 = scmp.eq.s32.totalorder %s21, 2
    %p133 = por %p131, %p132
    %p135 = scmp.ne.s32.totalorder %s120, %s134
    %p136 = scmp.eq.s32.totalorder %s21, 0
    %p137 = por %p135, %p136
    %s139 = sadd.s32 %s138, 1
    %p142 = scmp.eq.s32.totalorder %s15, 2
    %p143 = scmp.ne.s32.totalorder %s138, %s140
    %p144 = scmp.eq.s32.totalorder %s15, 0
    %p145 = por %p143, %p144
    %p146 = scmp.ne.s32.totalorder %s138, %s140
    %p147 = scmp.eq.s32.totalorder %s20, 2
    %p148 = por %p146, %p147
    %p149 = scmp.ne.s32.totalorder %s140, %s141
    %p150 = scmp.eq.s32.totalorder %s20, 0
    %p151 = por %p149, %p150
    %p152 = scmp.ne.s32.totalorder %s140, %s141
    %p153 = scmp.eq.s32.totalorder %s21, 2
    %p154 = por %p152, %p153
    %p156 = scmp.ne.s32.totalorder %s141, %s155
    %p157 = scmp.eq.s32.totalorder %s21, 0
    %p158 = por %p156, %p157
    %s159 = ssub.s32 %s15, %s22
    %p160 = scmp.eq.s32.totalorder %s159, 0
    %s162 = sadd.s32 %s161, 1
    %s163 = scalar_select %p160, %s161, %s162
    %p166 = pneg %p160
    %p167 = scmp.eq.s32.totalorder %s15, 2
    %p168 = por %p166, %p167
    %p169 = scmp.ne.s32.totalorder %s161, %s164
    %p170 = scmp.eq.s32.totalorder %s15, 0
    %p171 = por %p169, %p170
    %p172 = scmp.ne.s32.totalorder %s161, %s164
    %p173 = scmp.eq.s32.totalorder %s20, 2
    %p174 = por %p172, %p173
    %p175 = scmp.ne.s32.totalorder %s164, %s165
    %p176 = scmp.eq.s32.totalorder %s20, 0
    %p177 = por %p175, %p176
    %p178 = scmp.ne.s32.totalorder %s164, %s165
    %p179 = scmp.eq.s32.totalorder %s21, 2
    %p180 = por %p178, %p179
    %p182 = scmp.ne.s32.totalorder %s165, %s181
    %p183 = scmp.eq.s32.totalorder %s21, 0
    %p184 = por %p182, %p183
    %s185 = ssub.s32 %s15, %s22
    %p186 = scmp.eq.s32.totalorder %s185, 0
    %s188 = sadd.s32 %s187, 1
    %s189 = scalar_select %p186, %s187, %s188
    %p192 = pneg %p186
    %p193 = scmp.eq.s32.totalorder %s15, 2
    %p194 = por %p192, %p193
    %p195 = scmp.ne.s32.totalorder %s187, %s190
    %p196 = scmp.eq.s32.totalorder %s15, 0
    %p197 = por %p195, %p196
    %p198 = scmp.ne.s32.totalorder %s187, %s190
    %p199 = scmp.eq.s32.totalorder %s20, 2
    %p200 = por %p198, %p199
    %p201 = scmp.ne.s32.totalorder %s190, %s191
    %p202 = scmp.eq.s32.totalorder %s20, 0
    %p203 = por %p201, %p202
    %p204 = scmp.ne.s32.totalorder %s190, %s191
    %p205 = scmp.eq.s32.totalorder %s21, 2
    %p206 = por %p204, %p205
    %p208 = scmp.ne.s32.totalorder %s191, %s207
    %p209 = scmp.eq.s32.totalorder %s21, 0
    %p210 = por %p208, %p209
    %s211 = ssub.s32 %s15, %s22
    %p212 = scmp.eq.s32.totalorder %s211, 0
    %s214 = sadd.s32 %s213, 1
    %s215 = scalar_select %p212, %s213, %s214
    %p218 = pneg %p212
    %p219 = scmp.eq.s32.totalorder %s15, 2
    %p220 = por %p218, %p219
    %p221 = scmp.ne.s32.totalorder %s213, %s216
    %p222 = scmp.eq.s32.totalorder %s15, 0
    %p223 = por %p221, %p222
    %p224 = scmp.ne.s32.totalorder %s213, %s216
    %p225 = scmp.eq.s32.totalorder %s20, 2
    %p226 = por %p224, %p225
    %p227 = scmp.ne.s32.totalorder %s216, %s217
    %p228 = scmp.eq.s32.totalorder %s20, 0
    %p229 = por %p227, %p228
    %p230 = scmp.ne.s32.totalorder %s216, %s217
    %p231 = scmp.eq.s32.totalorder %s21, 2
    %p232 = por %p230, %p231
    %p234 = scmp.ne.s32.totalorder %s217, %s233
    %p235 = scmp.eq.s32.totalorder %s21, 0
    %p236 = por %p234, %p235
    %p237 = scmp.le.s32.totalorder 1, %s15
    %p238 = scmp.lt.s32.totalorder %s15, 4
    %p239 = pnand %p237, %p238
    %p240 = pneg %p239
    // Predicated region
    $region9: #{autoencoder_forward.1} parent=5 // pred_check
      _
    $region10: #{autoencoder_forward.1} parent=5 // pred_check_branch
      %242 = sbr.rel (%p239) target = $region12
    $region11: #{autoencoder_forward.1} parent=5 // pred_region
      %s243 = ssub.s32 %s15, 1
      // Predicated region
      $region13: #{autoencoder_forward.1} parent=11 // pred_check
        %p244 = pneg %p88
      $region14: #{autoencoder_forward.1} parent=11 // pred_check_branch
        %246 = sbr.rel (%p244) target = $region16
      $region15: #{autoencoder_forward.1} parent=11 // pred_region
        _
      $region16: #{autoencoder_forward.1} parent=11 // pred_fallthru
        _
      // Predicated region
      $region17: #{autoencoder_forward.1} parent=11 // pred_check
        %p247 = pneg %p109
      $region18: #{autoencoder_forward.1} parent=11 // pred_check_branch
        %249 = sbr.rel (%p247) target = $region20
      $region19: #{autoencoder_forward.1} parent=11 // pred_region
        _
      $region20: #{autoencoder_forward.1} parent=11 // pred_fallthru
        _
      // Predicated region
      $region21: #{autoencoder_forward.1} parent=11 // pred_check
        %p250 = pneg %p130
      $region22: #{autoencoder_forward.1} parent=11 // pred_check_branch
        %252 = sbr.rel (%p250) target = $region24
      $region23: #{autoencoder_forward.1} parent=11 // pred_region
        _
      $region24: #{autoencoder_forward.1} parent=11 // pred_fallthru
        _
      // Predicated region
      $region25: #{autoencoder_forward.1} parent=11 // pred_check
        %p253 = pneg %p151
      $region26: #{autoencoder_forward.1} parent=11 // pred_check_branch
        %255 = sbr.rel (%p253) target = $region28
      $region27: #{autoencoder_forward.1} parent=11 // pred_region
        _
      $region28: #{autoencoder_forward.1} parent=11 // pred_fallthru
        _
    $region12: #{autoencoder_forward.1} parent=5 // pred_fallthru
      _
    %p256 = scmp.lt.s32.totalorder %s15, 3
    // Predicated region
    $region29: #{autoencoder_forward.1} parent=5 // pred_check
      %p257 = pneg %p256
    $region30: #{autoencoder_forward.1} parent=5 // pred_check_branch
      %259 = sbr.rel (%p257) target = $region32
    $region31: #{autoencoder_forward.1} parent=5 // pred_region
      // Predicated region
      $region33: #{autoencoder_forward.1} parent=31 // pred_check
        %p260 = pneg %p35
      $region34: #{autoencoder_forward.1} parent=31 // pred_check_branch
        %262 = sbr.rel (%p260) target = $region36
      $region35: #{autoencoder_forward.1} parent=31 // pred_region
        %p263 = scmp.lt.s32.totalorder %s15, 2
        %s264 = scalar_select %p263, %s15, 2
        %s265 = smul.addr %s264, 8
        %s266 = scalar_lea.vmem %s0, %s265
      $region36: #{autoencoder_forward.1} parent=31 // pred_fallthru
        _
      // Predicated region
      $region37: #{autoencoder_forward.1} parent=31 // pred_check
        %p267 = pneg %p61
      $region38: #{autoencoder_forward.1} parent=31 // pred_check_branch
        %269 = sbr.rel (%p267) target = $region40
      $region39: #{autoencoder_forward.1} parent=31 // pred_region
        %p270 = scmp.lt.s32.totalorder %s15, 2
        %s271 = scalar_select %p270, %s15, 2
        %s272 = smul.addr %s271, 8
        %s273 = scalar_lea.vmem %s1, %s272
      $region40: #{autoencoder_forward.1} parent=31 // pred_fallthru
        _
    $region32: #{autoencoder_forward.1} parent=5 // pred_fallthru
      _
    %p274 = scmp.le.s32.totalorder 1, %s15
    %p275 = scmp.lt.s32.totalorder %s15, 4
    %p276 = pnand %p274, %p275
    %p277 = pneg %p276
    // Predicated region
    $region41: #{autoencoder_forward.1} parent=5 // pred_check
      _
    $region42: #{autoencoder_forward.1} parent=5 // pred_check_branch
      %279 = sbr.rel (%p276) target = $region44
    $region43: #{autoencoder_forward.1} parent=5 // pred_region
      %s280 = ssub.s32 %s15, 1
      %p281 = scmp.lt.s32.totalorder %s20, 2
      %s282 = scalar_select %p281, %s20, 2
      %s283 = smul.addr %s282, 8
      %s284 = scalar_lea.vmem %s0, %s283
      %p285 = pneg %p41
      %p286 = pneg %p38
      %p287 = scmp.lt.s32.totalorder %s20, 2
      %s288 = scalar_select %p287, %s20, 2
      %s289 = smul.addr %s288, 8
      %s290 = scalar_lea.vmem %s1, %s289
      %p291 = pneg %p67
      %p292 = pneg %p64
      %p293 = pneg %p88
      %p294 = pneg %p85
      %p295 = pneg %p109
      %p296 = pneg %p106
      %p297 = pneg %p130
      %p298 = pneg %p127
      %p299 = pneg %p151
      %p300 = pneg %p148
      %p301 = pneg %p177
      %p302 = pneg %p174
      %p303 = scmp.lt.s32.totalorder %s20, 2
      %s304 = scalar_select %p303, %s20, 2
      %s305 = smul.addr %s304, 8
      %s306 = scalar_lea.vmem %s6, %s305
      %p307 = pneg %p203
      %p308 = pneg %p200
      %p309 = scmp.lt.s32.totalorder %s20, 2
      %s310 = scalar_select %p309, %s20, 2
      %s311 = smul.addr %s310, 8
      %s312 = scalar_lea.vmem %s7, %s311
      %p313 = pneg %p229
      %p314 = pneg %p226
      %p315 = scmp.lt.s32.totalorder %s20, 2
      %s316 = scalar_select %p315, %s20, 2
      %s317 = scalar_lea.vmem %s8, %s316
      %p318 = scmp.lt.s32.totalorder %s20, 2
      %s319 = scalar_select %p318, %s20, 2
      %s320 = smul.addr %s319, 8
      %s321 = scalar_lea.vmem %s0, %s320
      %p322 = scmp.lt.s32.totalorder %s20, 2
      %s323 = scalar_select %p322, %s20, 2
      %s324 = smul.addr %s323, 8
      %s325 = scalar_lea.vmem %s1, %s324
      %p326 = scmp.lt.s32.totalorder %s20, 2
      %s327 = scalar_select %p326, %s20, 2
      %s328 = smul.addr %s327, 8
      %s329 = scalar_lea.vmem %s6, %s328
      %p330 = scmp.lt.s32.totalorder %s20, 2
      %s331 = scalar_select %p330, %s20, 2
      %s332 = smul.addr %s331, 8
      %s333 = scalar_lea.vmem %s7, %s332
      %p334 = scmp.lt.s32.totalorder %s20, 2
      %s335 = scalar_select %p334, %s20, 2
      %s336 = scalar_lea.vmem %s8, %s335
      %v338 = vlaneseq
      %v339 = vshrl.u32 %v338, 7
      %s340 = smul.u32 %s20, 8
      %v341 = vstv %s340
      %v342 = vadd.s32 %v339, %v341
      %vm343 = vcmp.lt.s32.totalorder %v342, 21
      %v344 = vld [vmem:[%s321] sm:$0xff]
      %v345 = vpack.c.bf16 %v344, %v344
      %v346 = vld [vmem:[%s2] sm:$0xf]
      %v347 = vld [vmem:[%s2 + $0x4] sm:$0xf]
      %v348 = vld [vmem:[%s2 + $0x8] sm:$0xf]
      %v349 = vld [vmem:[%s2 + $0xc] sm:$0xf]
      %v350 = vld [vmem:[%s3] sm:$0x1]
      %v352 = vlaneseq
      %v353 = vshrl.u32 %v352, 7
      %v354 = vsub.s32 0, %v353
      %v355 = vrot.slane %v350, %v354
      %v361 = vunpack.c.l.b16 %v346
      %v362 = vunpack.c.l.b16 %v347
      %v363 = vunpack.c.l.b16 %v348
      %v364 = vunpack.c.l.b16 %v349
      %v365 = vpack.c.b16 %v362, %v361
      %v366 = vpack.c.b16 %v364, %v363
      %vm369 = vcmask 261120
      %v371 = vsel %vm369, %v345, 0
      %373 = vmatprep.subr.bf16.mxu0 0
      %374 = vmatpush1.bf16.msra.mxu0 %v365
      %375 = vmatprep.subr.bf16.mxu0 0
      %376 = vmatpush1.bf16.msra.mxu0 %v366
      %377 = vmatprep.subr.bf16.mxu0 0
      %378 = vmatpush1.bf16.msra.mxu0 0
      %379 = vmatprep.subr.bf16.mxu0 0
      %380 = vmatpush1.bf16.msra.mxu0 0
      %381 = vmatprep.subr.bf16.mxu0 0
      %382 = vmatpush1.bf16.msra.mxu0 0
      %383 = vmatprep.subr.bf16.mxu0 0
      %384 = vmatpush1.bf16.msra.mxu0 0
      %385 = vmatprep.subr.bf16.mxu0 0
      %386 = vmatpush1.bf16.msra.mxu0 0
      %387 = vmatprep.subr.bf16.mxu0 0
      %388 = vmatpush1.bf16.msra.mxu0 0
      %389 = vmatprep.subr.bf16.mxu0 0
      %390 = vmatpush1.bf16.msra.mxu0 0
      %391 = vmatprep.subr.bf16.mxu0 0
      %392 = vmatpush1.bf16.msra.mxu0 0
      %393 = vmatprep.subr.bf16.mxu0 0
      %394 = vmatpush1.bf16.msra.mxu0 0
      %395 = vmatprep.subr.bf16.mxu0 0
      %396 = vmatpush1.bf16.msra.mxu0 0
      %397 = vmatprep.subr.bf16.mxu0 0
      %398 = vmatpush1.bf16.msra.mxu0 0
      %399 = vmatprep.subr.bf16.mxu0 0
      %400 = vmatpush1.bf16.msra.mxu0 0
      %401 = vmatprep.subr.bf16.mxu0 0
      %402 = vmatpush1.bf16.msra.mxu0 0
      %403 = vmatprep.subr.bf16.mxu0 0
      %404 = vmatpush1.bf16.msra.mxu0 0
      %405 = vmatprep.mubr.bf16.mxu0 0
      %406 = vmatmul.mubr.bf16.gmra.mrb[0].mxu0 %v371
      %v407 = vpop.f32.mrb[0].mxu0
      %v408 = vadd.f32 %v355, %v407
      %v409 = vpop.f32.mrb[0].mxu0
      %v410 = vpop.f32.mrb[0].mxu0
      %v411 = vpop.f32.mrb[0].mxu0
      %412 = vdwg.mxu0
      %v413 = vpack.c.bf16 %v408, %v408
      %v414 = vld [vmem:[%s4] sm:$0xf]
      %v415 = vld [vmem:[%s4 + $0x4] sm:$0xf]
      %v416 = vld [vmem:[%s4 + $0x8] sm:$0xf]
      %v417 = vld [vmem:[%s4 + $0xc] sm:$0xf]
      %v418 = vld [vmem:[%s4 + $0x10] sm:$0xf]
      %v419 = vld [vmem:[%s4 + $0x14] sm:$0xf]
      %v420 = vld [vmem:[%s4 + $0x18] sm:$0xf]
      %v421 = vld [vmem:[%s4 + $0x1c] sm:$0xf]
      %v422 = vld [vmem:[%s5] sm:$0x1]
      %v424 = vlaneseq
      %v425 = vshrl.u32 %v424, 7
      %v426 = vsub.s32 0, %v425
      %v427 = vrot.slane %v422, %v426
      %v437 = vunpack.c.l.b16 %v414
      %v438 = vunpack.c.l.b16 %v415
      %v439 = vunpack.c.l.b16 %v416
      %v440 = vunpack.c.l.b16 %v417
      %v441 = vunpack.c.l.b16 %v418
      %v442 = vunpack.c.l.b16 %v419
      %v443 = vunpack.c.l.b16 %v420
      %v444 = vunpack.c.l.b16 %v421
      %v445 = vpack.c.b16 %v438, %v437
      %v446 = vpack.c.b16 %v440, %v439
      %v447 = vpack.c.b16 %v442, %v441
      %v448 = vpack.c.b16 %v444, %v443
      %vm453 = vcmask 523264
      %v455 = vsel %vm453, %v413, 0
      %457 = vmatprep.subr.bf16.mxu0 0
      %458 = vmatpush1.bf16.msra.mxu0 %v445
      %459 = vmatprep.subr.bf16.mxu0 0
      %460 = vmatpush1.bf16.msra.mxu0 %v446
      %461 = vmatprep.subr.bf16.mxu0 0
      %462 = vmatpush1.bf16.msra.mxu0 %v447
      %463 = vmatprep.subr.bf16.mxu0 0
      %464 = vmatpush1.bf16.msra.mxu0 %v448
      %465 = vmatprep.subr.bf16.mxu0 0
      %466 = vmatpush1.bf16.msra.mxu0 0
      %467 = vmatprep.subr.bf16.mxu0 0
      %468 = vmatpush1.bf16.msra.mxu0 0
      %469 = vmatprep.subr.bf16.mxu0 0
      %470 = vmatpush1.bf16.msra.mxu0 0
      %471 = vmatprep.subr.bf16.mxu0 0
      %472 = vmatpush1.bf16.msra.mxu0 0
      %473 = vmatprep.subr.bf16.mxu0 0
      %474 = vmatpush1.bf16.msra.mxu0 0
      %475 = vmatprep.subr.bf16.mxu0 0
      %476 = vmatpush1.bf16.msra.mxu0 0
      %477 = vmatprep.subr.bf16.mxu0 0
      %478 = vmatpush1.bf16.msra.mxu0 0
      %479 = vmatprep.subr.bf16.mxu0 0
      %480 = vmatpush1.bf16.msra.mxu0 0
      %481 = vmatprep.subr.bf16.mxu0 0
      %482 = vmatpush1.bf16.msra.mxu0 0
      %483 = vmatprep.subr.bf16.mxu0 0
      %484 = vmatpush1.bf16.msra.mxu0 0
      %485 = vmatprep.subr.bf16.mxu0 0
      %486 = vmatpush1.bf16.msra.mxu0 0
      %487 = vmatprep.subr.bf16.mxu0 0
      %488 = vmatpush1.bf16.msra.mxu0 0
      %489 = vmatprep.mubr.bf16.mxu0 0
      %490 = vmatmul.mubr.bf16.gmra.mrb[0].mxu0 %v455
      %v491 = vpop.f32.mrb[0].mxu0
      %v492 = vadd.f32 %v427, %v491
      %v493 = vpop.f32.mrb[0].mxu0
      %v494 = vpop.f32.mrb[0].mxu0
      %v495 = vpop.f32.mrb[0].mxu0
      %496 = vdwg.mxu0
      %v497 = vsub.f32 %v344, %v492
      %v498 = vsel %vm343, 1, 0
      %vm499 = vcmp.eq.s32.totalorder %v498, 1
      %v500 = vsel %vm499, %v497, 0.0
      %501 = vst.msk [vmem:[%s329] sm:$0xff] %vm453, %v408
      %v502 = vmul.f32 %v500, %v500
      %v503 = vsel %vm369, %v502, 0.0
      %v504 = vrot.slane %v503, 4
      %v505 = vadd.f32 %v503, %v504
      %v506 = vrot.slane %v505, 2
      %v507 = vadd.f32 %v505, %v506
      %v508 = vrot.slane %v507, 1
      %v509 = vadd.f32 %v507, %v508
      %v510 = vld [vmem:[%s325] sm:$0xff]
      %v511 = vpack.c.bf16 %v510, %v510
      %v512 = vld [vmem:[%s2] sm:$0xf]
      %v513 = vld [vmem:[%s2 + $0x4] sm:$0xf]
      %v514 = vld [vmem:[%s2 + $0x8] sm:$0xf]
      %v515 = vld [vmem:[%s2 + $0xc] sm:$0xf]
      %v516 = vld [vmem:[%s3] sm:$0x1]
      %v518 = vlaneseq
      %v519 = vshrl.u32 %v518, 7
      %v520 = vsub.s32 0, %v519
      %v521 = vrot.slane %v516, %v520
      %v527 = vunpack.c.l.b16 %v512
      %v528 = vunpack.c.l.b16 %v513
      %v529 = vunpack.c.l.b16 %v514
      %v530 = vunpack.c.l.b16 %v515
      %v531 = vpack.c.b16 %v528, %v527
      %v532 = vpack.c.b16 %v530, %v529
      %v536 = vsel %vm369, %v511, 0
      %538 = vmatprep.subr.bf16.mxu0 0
      %539 = vmatpush1.bf16.msra.mxu0 %v531
      %540 = vmatprep.subr.bf16.mxu0 0
      %541 = vmatpush1.bf16.msra.mxu0 %v532
      %542 = vmatprep.subr.bf16.mxu0 0
      %543 = vmatpush1.bf16.msra.mxu0 0
      %544 = vmatprep.subr.bf16.mxu0 0
      %545 = vmatpush1.bf16.msra.mxu0 0
      %546 = vmatprep.subr.bf16.mxu0 0
      %547 = vmatpush1.bf16.msra.mxu0 0
      %548 = vmatprep.subr.bf16.mxu0 0
      %549 = vmatpush1.bf16.msra.mxu0 0
      %550 = vmatprep.subr.bf16.mxu0 0
      %551 = vmatpush1.bf16.msra.mxu0 0
      %552 = vmatprep.subr.bf16.mxu0 0
      %553 = vmatpush1.bf16.msra.mxu0 0
      %554 = vmatprep.subr.bf16.mxu0 0
      %555 = vmatpush1.bf16.msra.mxu0 0
      %556 = vmatprep.subr.bf16.mxu0 0
      %557 = vmatpush1.bf16.msra.mxu0 0
      %558 = vmatprep.subr.bf16.mxu0 0
      %559 = vmatpush1.bf16.msra.mxu0 0
      %560 = vmatprep.subr.bf16.mxu0 0
      %561 = vmatpush1.bf16.msra.mxu0 0
      %562 = vmatprep.subr.bf16.mxu0 0
      %563 = vmatpush1.bf16.msra.mxu0 0
      %564 = vmatprep.subr.bf16.mxu0 0
      %565 = vmatpush1.bf16.msra.mxu0 0
      %566 = vmatprep.subr.bf16.mxu0 0
      %567 = vmatpush1.bf16.msra.mxu0 0
      %568 = vmatprep.subr.bf16.mxu0 0
      %569 = vmatpush1.bf16.msra.mxu0 0
      %570 = vmatprep.mubr.bf16.mxu0 0
      %571 = vmatmul.mubr.bf16.gmra.mrb[0].mxu0 %v536
      %v572 = vpop.f32.mrb[0].mxu0
      %v573 = vadd.f32 %v521, %v572
      %v574 = vpop.f32.mrb[0].mxu0
      %v575 = vpop.f32.mrb[0].mxu0
      %v576 = vpop.f32.mrb[0].mxu0
      %577 = vdwg.mxu0
      %v578 = vpack.c.bf16 %v573, %v573
      %v579 = vld [vmem:[%s4] sm:$0xf]
      %v580 = vld [vmem:[%s4 + $0x4] sm:$0xf]
      %v581 = vld [vmem:[%s4 + $0x8] sm:$0xf]
      %v582 = vld [vmem:[%s4 + $0xc] sm:$0xf]
      %v583 = vld [vmem:[%s4 + $0x10] sm:$0xf]
      %v584 = vld [vmem:[%s4 + $0x14] sm:$0xf]
      %v585 = vld [vmem:[%s4 + $0x18] sm:$0xf]
      %v586 = vld [vmem:[%s4 + $0x1c] sm:$0xf]
      %v587 = vld [vmem:[%s5] sm:$0x1]
      %v589 = vlaneseq
      %v590 = vshrl.u32 %v589, 7
      %v591 = vsub.s32 0, %v590
      %v592 = vrot.slane %v587, %v591
      %v602 = vunpack.c.l.b16 %v579
      %v603 = vunpack.c.l.b16 %v580
      %v604 = vunpack.c.l.b16 %v581
      %v605 = vunpack.c.l.b16 %v582
      %v606 = vunpack.c.l.b16 %v583
      %v607 = vunpack.c.l.b16 %v584
      %v608 = vunpack.c.l.b16 %v585
      %v609 = vunpack.c.l.b16 %v586
      %v610 = vpack.c.b16 %v603, %v602
      %v611 = vpack.c.b16 %v605, %v604
      %v612 = vpack.c.b16 %v607, %v606
      %v613 = vpack.c.b16 %v609, %v608
      %v619 = vsel %vm453, %v578, 0
      %621 = vmatprep.subr.bf16.mxu0 0
      %622 = vmatpush1.bf16.msra.mxu0 %v610
      %623 = vmatprep.subr.bf16.mxu0 0
      %624 = vmatpush1.bf16.msra.mxu0 %v611
      %625 = vmatprep.subr.bf16.mxu0 0
      %626 = vmatpush1.bf16.msra.mxu0 %v612
      %627 = vmatprep.subr.bf16.mxu0 0
      %628 = vmatpush1.bf16.msra.mxu0 %v613
      %629 = vmatprep.subr.bf16.mxu0 0
      %630 = vmatpush1.bf16.msra.mxu0 0
      %631 = vmatprep.subr.bf16.mxu0 0
      %632 = vmatpush1.bf16.msra.mxu0 0
      %633 = vmatprep.subr.bf16.mxu0 0
      %634 = vmatpush1.bf16.msra.mxu0 0
      %635 = vmatprep.subr.bf16.mxu0 0
      %636 = vmatpush1.bf16.msra.mxu0 0
      %637 = vmatprep.subr.bf16.mxu0 0
      %638 = vmatpush1.bf16.msra.mxu0 0
      %639 = vmatprep.subr.bf16.mxu0 0
      %640 = vmatpush1.bf16.msra.mxu0 0
      %641 = vmatprep.subr.bf16.mxu0 0
      %642 = vmatpush1.bf16.msra.mxu0 0
      %643 = vmatprep.subr.bf16.mxu0 0
      %644 = vmatpush1.bf16.msra.mxu0 0
      %645 = vmatprep.subr.bf16.mxu0 0
      %646 = vmatpush1.bf16.msra.mxu0 0
      %647 = vmatprep.subr.bf16.mxu0 0
      %648 = vmatpush1.bf16.msra.mxu0 0
      %649 = vmatprep.subr.bf16.mxu0 0
      %650 = vmatpush1.bf16.msra.mxu0 0
      %651 = vmatprep.subr.bf16.mxu0 0
      %652 = vmatpush1.bf16.msra.mxu0 0
      %653 = vmatprep.mubr.bf16.mxu0 0
      %654 = vmatmul.mubr.bf16.gmra.mrb[0].mxu0 %v619
      %v655 = vpop.f32.mrb[0].mxu0
      %v656 = vadd.f32 %v592, %v655
      %v657 = vpop.f32.mrb[0].mxu0
      %v658 = vpop.f32.mrb[0].mxu0
      %v659 = vpop.f32.mrb[0].mxu0
      %660 = vdwg.mxu0
      %v661 = vsub.f32 %v510, %v656
      %v662 = vsel %vm499, %v661, 0.0
      %663 = vst.msk [vmem:[%s333] sm:$0xff] %vm453, %v573
      %v664 = vmul.f32 %v662, %v662
      %v665 = vsel %vm369, %v664, 0.0
      %v666 = vrot.slane %v665, 4
      %v667 = vadd.f32 %v665, %v666
      %v668 = vrot.slane %v667, 2
      %v669 = vadd.f32 %v667, %v668
      %v670 = vrot.slane %v669, 1
      %v671 = vadd.f32 %v669, %v670
      %v672 = vadd.f32 %v509, %v671
      %vm673 = vcmask 253952
      %674 = vst.msk [vmem:[%s336] sm:$0x1] %vm673, %v672
      %p675 = scmp.lt.s32.totalorder %s20, 2
      %s676 = scalar_select %p675, %s20, 2
      %s677 = smul.addr %s676, 8
      %s678 = scalar_lea.vmem %s6, %s677
      %p679 = scmp.lt.s32.totalorder %s20, 2
      %s680 = scalar_select %p679, %s20, 2
      %s681 = smul.addr %s680, 8
      %s682 = scalar_lea.vmem %s7, %s681
      %p683 = scmp.lt.s32.totalorder %s20, 2
      %s684 = scalar_select %p683, %s20, 2
      %s685 = scalar_lea.vmem %s8, %s684
      // Predicated region
      $region45: #{autoencoder_forward.1} parent=43 // pred_check
        %p686 = pneg %p174
      $region46: #{autoencoder_forward.1} parent=43 // pred_check_branch
        %688 = sbr.rel (%p686) target = $region48
      $region47: #{autoencoder_forward.1} parent=43 // pred_region
        _
      $region48: #{autoencoder_forward.1} parent=43 // pred_fallthru
        _
      // Predicated region
      $region49: #{autoencoder_forward.1} parent=43 // pred_check
        %p689 = pneg %p200
      $region50: #{autoencoder_forward.1} parent=43 // pred_check_branch
        %691 = sbr.rel (%p689) target = $region52
      $region51: #{autoencoder_forward.1} parent=43 // pred_region
        _
      $region52: #{autoencoder_forward.1} parent=43 // pred_fallthru
        _
      // Predicated region
      $region53: #{autoencoder_forward.1} parent=43 // pred_check
        %p692 = pneg %p226
      $region54: #{autoencoder_forward.1} parent=43 // pred_check_branch
        %694 = sbr.rel (%p692) target = $region56
      $region55: #{autoencoder_forward.1} parent=43 // pred_region
        _
      $region56: #{autoencoder_forward.1} parent=43 // pred_fallthru
        _
    $region44: #{autoencoder_forward.1} parent=5 // pred_fallthru
      _
    %p695 = scmp.le.s32.totalorder 2, %s15
    // Predicated region
    $region57: #{autoencoder_forward.1} parent=5 // pred_check
      %p696 = pneg %p695
    $region58: #{autoencoder_forward.1} parent=5 // pred_check_branch
      %698 = sbr.rel (%p696) target = $region60
    $region59: #{autoencoder_forward.1} parent=5 // pred_region
      %s699 = ssub.s32 %s15, 2
      // Predicated region
      $region61: #{autoencoder_forward.1} parent=59 // pred_check
        %p700 = pneg %p180
      $region62: #{autoencoder_forward.1} parent=59 // pred_check_branch
        %702 = sbr.rel (%p700) target = $region64
      $region63: #{autoencoder_forward.1} parent=59 // pred_region
        %p703 = scmp.lt.s32.totalorder %s21, 2
        %s704 = scalar_select %p703, %s21, 2
        %s705 = smul.addr %s704, 8
        %s706 = scalar_lea.vmem %s6, %s705
      $region64: #{autoencoder_forward.1} parent=59 // pred_fallthru
        _
      // Predicated region
      $region65: #{autoencoder_forward.1} parent=59 // pred_check
        %p707 = pneg %p206
      $region66: #{autoencoder_forward.1} parent=59 // pred_check_branch
        %709 = sbr.rel (%p707) target = $region68
      $region67: #{autoencoder_forward.1} parent=59 // pred_region
        %p710 = scmp.lt.s32.totalorder %s21, 2
        %s711 = scalar_select %p710, %s21, 2
        %s712 = smul.addr %s711, 8
        %s713 = scalar_lea.vmem %s7, %s712
      $region68: #{autoencoder_forward.1} parent=59 // pred_fallthru
        _
      // Predicated region
      $region69: #{autoencoder_forward.1} parent=59 // pred_check
        %p714 = pneg %p232
      $region70: #{autoencoder_forward.1} parent=59 // pred_check_branch
        %716 = sbr.rel (%p714) target = $region72
      $region71: #{autoencoder_forward.1} parent=59 // pred_region
        %p717 = scmp.lt.s32.totalorder %s21, 2
        %s718 = scalar_select %p717, %s21, 2
        %s719 = scalar_lea.vmem %s8, %s718
      $region72: #{autoencoder_forward.1} parent=59 // pred_fallthru
        _
    $region60: #{autoencoder_forward.1} parent=5 // pred_fallthru
      _
  $region6: #{autoencoder_forward.1} parent=0 // loop_footer
    %s19 = sadd.s32 1, %s15
  $region7: #{autoencoder_forward.1} parent=0 // loop_footer_branch
    %14 = sbr.rel target = $region3
  $region8: #{autoencoder_forward.1} parent=0 // loop_exit
    _

</llo_original>
